<compile_context>
chip_gen: v7x
topology: tpu7x:2x2x1
jax: 0.10.0
libtpu: 0.0.40
codegen_flags: <defaults>
</compile_context>

<pallas_src>
import functools

import numpy as np
import jax
import jax.numpy as jnp
from jax.experimental import pallas as pl
from jax.experimental.pallas import tpu as pltpu

_VMEM_SPEC = pl.BlockSpec(memory_space=pltpu.MemorySpace.VMEM)


# ----------------------------------------------------------------------------
# The fused Pallas kernel (entire forward pass)
# ----------------------------------------------------------------------------
def _eel_gcn_fused_kernel(*refs, n_layers, num_rel):
    it = iter(refs)
    nxt = lambda: next(it)

    a_chr, x_chr, p_chr = nxt(), nxt(), nxt()
    cgc = [nxt() for _ in range(n_layers[0])]
    a_slv, x_slv, p_slv = nxt(), nxt(), nxt()
    sgc = [nxt() for _ in range(n_layers[1])]
    a_rel, x_mn, p_ev, p_od = nxt(), nxt(), nxt(), nxt()
    igc = [nxt() for _ in range(n_layers[2])]
    head_w, head_b = nxt(), nxt()
    w1, b1, w2, b2 = nxt(), nxt(), nxt(), nxt()
    o_ref = nxt()

    # --- plain GCN stack: h <- relu(A @ (h @ W)) per layer, A resident in VMEM
    def gcn_stack(a_ref, x_ref, w_refs):
        a = a_ref[...]                         # bf16 (n, n), loaded once per stack
        h = x_ref[...]                         # bf16 (n, f)
        out = None
        for w_ref in w_refs:
            xw = jnp.dot(h, w_ref[...], preferred_element_type=jnp.float32)
            out = jnp.maximum(
                jnp.dot(a, xw.astype(jnp.bfloat16),
                        preferred_element_type=jnp.float32), 0.0)
            h = out.astype(jnp.bfloat16)
        return out                             # f32 (n, d_last)

    c = gcn_stack(a_chr, x_chr, cgc)
    s = gcn_stack(a_slv, x_slv, sgc)

    # --- FastRGCN stack (root_weight=False, bias=False):
    #       AX_cat = [A_0@h | ... | A_{R-1}@h]  (n, R*f)
    #       h      = relu(AX_cat @ W_cat)        with W_cat = concat_r(W_r, axis=0)
    h = x_mn[...]                              # bf16 (n, f)
    hm = None
    for w_ref in igc:                          # w_ref: bf16 (R*f_in, d)
        ax = jnp.concatenate(
            [jnp.dot(a_rel[r], h, preferred_element_type=jnp.float32)
             for r in range(num_rel)], axis=1)
        hm = jnp.maximum(
            jnp.dot(ax.astype(jnp.bfloat16), w_ref[...],
                    preferred_element_type=jnp.float32), 0.0)
        h = hm.astype(jnp.bfloat16)

    # --- global add/mean pooling as selector matmuls (f32)
    cg = jnp.dot(p_chr[...], c, preferred_element_type=jnp.float32)
    sg = jnp.dot(p_slv[...], s, preferred_element_type=jnp.float32)
    chg = jnp.dot(p_ev[...], hm, preferred_element_type=jnp.float32)   # == hg[0::2]
    shg = jnp.dot(p_od[...], hm, preferred_element_type=jnp.float32)   # == hg[1::2]

    # --- fused head: the 4 branch linears are ONE block-diagonal matmul,
    #     then fc1 + fc2, all in VMEM.
    cat = jnp.concatenate((cg, sg, chg, shg), axis=1)                   # (G, 2*dim)
    hg = jnp.maximum(
        jnp.dot(cat, head_w[...], preferred_element_type=jnp.float32)
        + head_b[...], 0.0)
    hg = jnp.maximum(
        jnp.dot(hg, w1[...], preferred_element_type=jnp.float32) + b1[...], 0.0)
    o_ref[...] = (jnp.dot(hg, w2[...], preferred_element_type=jnp.float32)
                  + b2[...])


def _cost_estimate(prep, n_layers, num_rel):
    dot = lambda m, k, n: 2 * m * k * n
    fl = 0
    n_c, f = prep["a_chr"].shape[0], prep["x_chr"].shape[1]
    for w in prep["cgc"]:
        fl += dot(n_c, f, w.shape[1]) + dot(n_c, n_c, w.shape[1]); f = w.shape[1]
    n_s, f = prep["a_slv"].shape[0], prep["x_slv"].shape[1]
    for w in prep["sgc"]:
        fl += dot(n_s, f, w.shape[1]) + dot(n_s, n_s, w.shape[1]); f = w.shape[1]
    n_m, f = prep["a_rel"].shape[1], prep["x"].shape[1]
    for w in prep["igc_cat"]:
        fl += num_rel * dot(n_m, n_m, f) + dot(n_m, num_rel * f, w.shape[1])
        f = w.shape[1]
    g = prep["p_chr"].shape[0]
    half = prep["head_w"].shape[0] // 4
    fl += dot(g, n_c, half) + dot(g, n_s, half) + 2 * dot(g, n_m, half)
    fl += dot(g, prep["head_w"].shape[0], prep["head_w"].shape[1])
    fl += dot(g, prep["fc1_w"].shape[0], prep["fc1_w"].shape[1])
    fl += dot(g, prep["fc2_w"].shape[0], prep["fc2_w"].shape[1])
    byt = sum(int(v.size) * v.dtype.itemsize
              for v in jax.tree_util.tree_leaves(prep)) + g * 4
    return pl.CostEstimate(flops=int(fl), transcendentals=0, bytes_accessed=int(byt))


def eel_gcn_forward(prep, n_layers, num_rel):
    refs = (
        prep["a_chr"], prep["x_chr"], prep["p_chr"], *prep["cgc"],
        prep["a_slv"], prep["x_slv"], prep["p_slv"], *prep["sgc"],
        prep["a_rel"], prep["x"], prep["p_even"], prep["p_odd"], *prep["igc_cat"],
        prep["head_w"], prep["head_b"],
        prep["fc1_w"], prep["fc1_b"], prep["fc2_w"], prep["fc2_b"],
    )
    num_graphs = prep["p_chr"].shape[0]
    return pl.pallas_call(
        functools.partial(_eel_gcn_fused_kernel, n_layers=n_layers, num_rel=num_rel),
        out_shape=jax.ShapeDtypeStruct((num_graphs, 1), jnp.float32),
        in_specs=[_VMEM_SPEC] * len(refs),
        out_specs=_VMEM_SPEC,
        cost_estimate=_cost_estimate(prep, n_layers, num_rel),
    )(*refs)


# ----------------------------------------------------------------------------
# Host-side (numpy) static-graph preprocessing -- built once, not per forward
# ----------------------------------------------------------------------------
def dense_adj(edge_index, num_nodes, aggr):
    a = np.zeros((num_nodes, num_nodes), np.float32)
    src, dst = np.asarray(edge_index)
    np.add.at(a, (dst, src), 1.0)
    if aggr == "mean":
        a = a / np.maximum(a.sum(axis=1, keepdims=True), 1.0)
    return a


def dense_rel_adj(edge_index, edge_type, num_rel, num_nodes, aggr):
    a = np.zeros((num_rel, num_nodes, num_nodes), np.float32)
    src, dst = np.asarray(edge_index)
    np.add.at(a, (np.asarray(edge_type), dst, src), 1.0)
    if aggr == "mean":
        # FastRGCNConv aggregates once over ALL incoming edges (not per relation).
        deg = np.maximum(a.sum(axis=(0, 2), keepdims=True), 1.0)
        a = a / deg
    return a


def pool_matrix(batch, num_groups, pooling):
    batch = np.asarray(batch)
    n = batch.shape[0]
    p = np.zeros((num_groups, n), np.float32)
    p[batch, np.arange(n)] = 1.0
    if pooling == "mean":
        p = p / np.maximum(p.sum(axis=1, keepdims=True), 1.0)
    return p


def block_diag(mats):
    mats = [np.asarray(m, np.float32) for m in mats]
    rows = sum(m.shape[0] for m in mats)
    cols = sum(m.shape[1] for m in mats)
    out = np.zeros((rows, cols), np.float32)
    r = c = 0
    for m in mats:
        out[r:r + m.shape[0], c:c + m.shape[1]] = m
        r += m.shape[0]
        c += m.shape[1]
    return out


def ring_edges(num_graphs, nodes_per_graph):
    src, dst = [], []
    for g in range(num_graphs):
        off = g * nodes_per_graph
        for i in range(nodes_per_graph):
            a, b = off + i, off + (i + 1) % nodes_per_graph
            src += [a, b]
            dst += [b, a]
    return np.array([src, dst], dtype=np.int32)


def prepare_inputs(params, graph, pseudo_batch, num_rel, aggr, pooling):
    """Densify the static graph once, cast the matmul operands to bf16,
    fold the four head linears into one block-diagonal weight."""
    num_graphs = int(np.asarray(graph["chr_x_batch"]).max()) + 1
    a_chr = dense_adj(graph["chr_edge_index"], graph["chr_x"].shape[0], aggr)
    a_slv = dense_adj(graph["slv_edge_index"], graph["slv_x"].shape[0], aggr)
    a_rel = dense_rel_adj(graph["edge_index"], graph["edge_type"], num_rel,
                          graph["x"].shape[0], aggr)
    p_chr = pool_matrix(graph["chr_x_batch"], num_graphs, pooling)
    p_slv = pool_matrix(graph["slv_x_batch"], num_graphs, pooling)
    p_pse = pool_matrix(pseudo_batch, 2 * num_graphs, pooling)

    head_w = block_diag([params["cfc_w"], params["sfc_w"],
                         params["icfc_w"], params["isfc_w"]])
    head_b = np.concatenate([np.asarray(params["cfc_b"], np.float32),
                             np.asarray(params["sfc_b"], np.float32),
                             np.asarray(params["icfc_b"], np.float32),
                             np.asarray(params["isfc_b"], np.float32)], axis=1)

    bf16 = jnp.bfloat16
    return {
        # adjacency (normalised in f32, then cast) and node features in bf16
        "a_chr": jnp.asarray(a_chr, bf16),
        "a_slv": jnp.asarray(a_slv, bf16),
        "a_rel": jnp.asarray(a_rel, bf16),
        "x_chr": jnp.asarray(graph["chr_x"], bf16),
        "x_slv": jnp.asarray(graph["slv_x"], bf16),
        "x": jnp.asarray(graph["x"], bf16),
        # pooling selectors stay f32 (exact for add, 1/deg in f32 for mean)
        "p_chr": jnp.asarray(p_chr, jnp.float32),
        "p_slv": jnp.asarray(p_slv, jnp.float32),
        "p_even": jnp.asarray(p_pse[0::2], jnp.float32),   # hg[0::2] selector
        "p_odd": jnp.asarray(p_pse[1::2], jnp.float32),    # hg[1::2] selector
        # graph-conv weights in bf16; RGCN weights row-concatenated per layer
        "cgc": [jnp.asarray(w, bf16) for w in params["cgc"]],
        "sgc": [jnp.asarray(w, bf16) for w in params["sgc"]],
        "igc_cat": [jnp.asarray(w, bf16).reshape(-1, w.shape[-1])
                    for w in params["igc"]],
        # head stays f32 (tiny); 4 branch linears fused into one block-diag dot
        "head_w": jnp.asarray(head_w, jnp.float32),
        "head_b": jnp.asarray(head_b, jnp.float32),
        "fc1_w": params["fc1_w"], "fc1_b": params["fc1_b"],
        "fc2_w": params["fc2_w"], "fc2_b": params["fc2_b"],
    }


# ----------------------------------------------------------------------------
# Pure-f32 jnp reference with identical math (sanity check only)
# ----------------------------------------------------------------------------
def eel_gcn_reference(params, graph, pseudo_batch, n_layers, num_rel, aggr, pooling):
    num_graphs = int(np.asarray(graph["chr_x_batch"]).max()) + 1
    a_chr = jnp.asarray(dense_adj(graph["chr_edge_index"], graph["chr_x"].shape[0], aggr))
    a_slv = jnp.asarray(dense_adj(graph["slv_edge_index"], graph["slv_x"].shape[0], aggr))
    a_rel = jnp.asarray(dense_rel_adj(graph["edge_index"], graph["edge_type"],
                                      num_rel, graph["x"].shape[0], aggr))
    relu = lambda z: jnp.maximum(z, 0.0)

    c = graph["chr_x"]
    for i in range(n_layers[0]):
        c = relu(a_chr @ (c @ params["cgc"][i]))
    s = graph["slv_x"]
    for i in range(n_layers[1]):
        s = relu(a_slv @ (s @ params["sgc"][i]))
    h = graph["x"]
    for i in range(n_layers[2]):
        w = params["igc"][i]
        h = relu(sum(a_rel[r] @ (h @ w[r]) for r in range(num_rel)))

    p_chr = jnp.asarray(pool_matrix(graph["chr_x_batch"], num_graphs, pooling))
    p_slv = jnp.asarray(pool_matrix(graph["slv_x_batch"], num_graphs, pooling))
    p_pse = jnp.asarray(pool_matrix(pseudo_batch, 2 * num_graphs, pooling))
    cg, sg, hg = p_chr @ c, p_slv @ s, p_pse @ h
    chg, shg = hg[0::2], hg[1::2]
    cg = relu(cg @ params["cfc_w"] + params["cfc_b"])
    sg = relu(sg @ params["sfc_w"] + params["sfc_b"])
    chg = relu(chg @ params["icfc_w"] + params["icfc_b"])
    shg = relu(shg @ params["isfc_w"] + params["isfc_b"])
    hg = relu(jnp.concatenate((cg, sg, chg, shg), axis=1) @ params["fc1_w"]
              + params["fc1_b"])
    return hg @ params["fc2_w"] + params["fc2_b"]


# ----------------------------------------------------------------------------
# Main
# ----------------------------------------------------------------------------
if __name__ == "__main__":
    # Hyperparameters (mirror eelGCN.__init__ arguments).
    num_node_feats = 8
    num_rel = 3
    dim = 32
    half = dim // 2
    n_layers = (2, 2, 2)          # each stack: feats->dim, dim->dim/2
    aggregation = "add"           # "mean" also supported (pre-normalised adjacency)
    pooling = "add"               # "mean" also supported
    num_graphs = 2

    key = jax.random.PRNGKey(0)
    ks = iter(jax.random.split(key, 32))
    scale = 0.2

    def w_(shape):
        return scale * jax.random.normal(next(ks), shape, dtype=jnp.float32)

    params = {
        # GCNConv weights stored as (in, out) so out = A @ (X @ W)
        "cgc": [w_((num_node_feats, dim)), w_((dim, half))],
        "sgc": [w_((num_node_feats, dim)), w_((dim, half))],
        # FastRGCNConv weights: (num_rel, in, out)
        "igc": [w_((num_rel, num_node_feats, dim)), w_((num_rel, dim, half))],
        # nn.Linear stored pre-transposed as (in, out); bias as (1, out)
        "cfc_w": w_((half, half)), "cfc_b": w_((1, half)),
        "sfc_w": w_((half, half)), "sfc_b": w_((1, half)),
        "icfc_w": w_((half, half)), "icfc_b": w_((1, half)),
        "isfc_w": w_((half, half)), "isfc_b": w_((1, half)),
        "fc1_w": w_((2 * dim, dim)), "fc1_b": w_((1, dim)),
        "fc2_w": w_((dim, 1)), "fc2_b": w_((1, 1)),
    }

    # Synthetic batched graph data (2 graphs, static ring topology).
    n_chr, n_slv, n_main = 12, 10, 16
    graph = {
        "chr_x": jax.random.normal(next(ks), (n_chr, num_node_feats), jnp.float32),
        "slv_x": jax.random.normal(next(ks), (n_slv, num_node_feats), jnp.float32),
        "x": jax.random.normal(next(ks), (n_main, num_node_feats), jnp.float32),
        "chr_edge_index": ring_edges(num_graphs, n_chr // num_graphs),
        "slv_edge_index": ring_edges(num_graphs, n_slv // num_graphs),
        "edge_index": ring_edges(2 * num_graphs, n_main // (2 * num_graphs)),
        "chr_x_batch": np.repeat(np.arange(num_graphs, dtype=np.int32),
                                 n_chr // num_graphs),
        "slv_x_batch": np.repeat(np.arange(num_graphs, dtype=np.int32),
                                 n_slv // num_graphs),
    }
    n_edges_main = graph["edge_index"].shape[1]
    graph["edge_type"] = np.arange(n_edges_main, dtype=np.int32) % num_rel
    # pseudo_batch: main-graph nodes pooled into 2 groups per graph
    # (even groups -> "chr side", odd groups -> "slv side" of each graph).
    pseudo_batch = np.repeat(np.arange(2 * num_graphs, dtype=np.int32),
                             n_main // (2 * num_graphs))

    prep = prepare_inputs(params, graph, pseudo_batch, num_rel, aggregation, pooling)

    out = eel_gcn_forward(prep, n_layers, num_rel)
    out = jax.block_until_ready(out)

    ref = eel_gcn_reference(params, graph, pseudo_batch, n_layers, num_rel,
                            aggregation, pooling)
    assert out.shape == (num_graphs, 1)
    # bf16 matmul inputs with f32 accumulation vs. the pure-f32 reference.
    assert jnp.allclose(out, ref, rtol=5e-2, atol=5e-2), (out, ref)

    print("KERNEL_OK")
</pallas_src>

<mosaic_0001>
module attributes {stable_mosaic.version = 11 : i64} {
  func.func @_eel_gcn_fused_kernel(%arg0: memref<12x12xbf16, #tpu.memory_space<vmem>>, %arg1: memref<12x8xbf16, #tpu.memory_space<vmem>>, %arg2: memref<2x12xf32, #tpu.memory_space<vmem>>, %arg3: memref<8x32xbf16, #tpu.memory_space<vmem>>, %arg4: memref<32x16xbf16, #tpu.memory_space<vmem>>, %arg5: memref<10x10xbf16, #tpu.memory_space<vmem>>, %arg6: memref<10x8xbf16, #tpu.memory_space<vmem>>, %arg7: memref<2x10xf32, #tpu.memory_space<vmem>>, %arg8: memref<8x32xbf16, #tpu.memory_space<vmem>>, %arg9: memref<32x16xbf16, #tpu.memory_space<vmem>>, %arg10: memref<3x16x16xbf16, #tpu.memory_space<vmem>>, %arg11: memref<16x8xbf16, #tpu.memory_space<vmem>>, %arg12: memref<2x16xf32, #tpu.memory_space<vmem>>, %arg13: memref<2x16xf32, #tpu.memory_space<vmem>>, %arg14: memref<24x32xbf16, #tpu.memory_space<vmem>>, %arg15: memref<96x16xbf16, #tpu.memory_space<vmem>>, %arg16: memref<64x64xf32, #tpu.memory_space<vmem>>, %arg17: memref<1x64xf32, #tpu.memory_space<vmem>>, %arg18: memref<64x32xf32, #tpu.memory_space<vmem>>, %arg19: memref<1x32xf32, #tpu.memory_space<vmem>>, %arg20: memref<32x1xf32, #tpu.memory_space<vmem>>, %arg21: memref<1x1xf32, #tpu.memory_space<vmem>>, %arg22: memref<2x1xf32, #tpu.memory_space<vmem>>) attributes {dimension_semantics = [], scalar_prefetch = 0 : i64, scratch_operands = 0 : i64, tpu.core_type = #tpu.core_type<tc>} {
    %c0 = arith.constant 0 : index
    %c0_0 = arith.constant 0 : index
    %0 = vector.load %arg0[%c0, %c0_0] : memref<12x12xbf16, #tpu.memory_space<vmem>>, vector<12x12xbf16>
    %c0_1 = arith.constant 0 : index
    %c0_2 = arith.constant 0 : index
    %1 = vector.load %arg1[%c0_1, %c0_2] : memref<12x8xbf16, #tpu.memory_space<vmem>>, vector<12x8xbf16>
    %c0_3 = arith.constant 0 : index
    %c0_4 = arith.constant 0 : index
    %2 = vector.load %arg3[%c0_3, %c0_4] : memref<8x32xbf16, #tpu.memory_space<vmem>>, vector<8x32xbf16>
    %cst = arith.constant dense<0.000000e+00> : vector<12x32xf32>
    %3 = tpu.matmul %1, %2, %cst {dimension_numbers = #tpu.dot_dimension_numbers<[1], [0], [0], [1], [0, 0, 1, 1], [], []>} : vector<12x8xbf16>, vector<8x32xbf16>, vector<12x32xf32> -> vector<12x32xf32>
    %4 = arith.truncf %3 : vector<12x32xf32> to vector<12x32xbf16>
    %cst_5 = arith.constant dense<0.000000e+00> : vector<12x32xf32>
    %5 = tpu.matmul %0, %4, %cst_5 {dimension_numbers = #tpu.dot_dimension_numbers<[1], [0], [0], [1], [0, 0, 1, 1], [], []>} : vector<12x12xbf16>, vector<12x32xbf16>, vector<12x32xf32> -> vector<12x32xf32>
    %cst_6 = arith.constant 0.000000e+00 : f32
    %6 = vector.broadcast %cst_6 : f32 to vector<12x32xf32>
    %7 = arith.maximumf %5, %6 : vector<12x32xf32>
    %8 = arith.truncf %7 : vector<12x32xf32> to vector<12x32xbf16>
    %c0_7 = arith.constant 0 : index
    %c0_8 = arith.constant 0 : index
    %9 = vector.load %arg4[%c0_7, %c0_8] : memref<32x16xbf16, #tpu.memory_space<vmem>>, vector<32x16xbf16>
    %cst_9 = arith.constant dense<0.000000e+00> : vector<12x16xf32>
    %10 = tpu.matmul %8, %9, %cst_9 {dimension_numbers = #tpu.dot_dimension_numbers<[1], [0], [0], [1], [0, 0, 1, 1], [], []>} : vector<12x32xbf16>, vector<32x16xbf16>, vector<12x16xf32> -> vector<12x16xf32>
    %11 = arith.truncf %10 : vector<12x16xf32> to vector<12x16xbf16>
    %cst_10 = arith.constant dense<0.000000e+00> : vector<12x16xf32>
    %12 = tpu.matmul %0, %11, %cst_10 {dimension_numbers = #tpu.dot_dimension_numbers<[1], [0], [0], [1], [0, 0, 1, 1], [], []>} : vector<12x12xbf16>, vector<12x16xbf16>, vector<12x16xf32> -> vector<12x16xf32>
    %cst_11 = arith.constant 0.000000e+00 : f32
    %13 = vector.broadcast %cst_11 : f32 to vector<12x16xf32>
    %14 = arith.maximumf %12, %13 : vector<12x16xf32>
    %c0_12 = arith.constant 0 : index
    %c0_13 = arith.constant 0 : index
    %15 = vector.load %arg5[%c0_12, %c0_13] : memref<10x10xbf16, #tpu.memory_space<vmem>>, vector<10x10xbf16>
    %c0_14 = arith.constant 0 : index
    %c0_15 = arith.constant 0 : index
    %16 = vector.load %arg6[%c0_14, %c0_15] : memref<10x8xbf16, #tpu.memory_space<vmem>>, vector<10x8xbf16>
    %c0_16 = arith.constant 0 : index
    %c0_17 = arith.constant 0 : index
    %17 = vector.load %arg8[%c0_16, %c0_17] : memref<8x32xbf16, #tpu.memory_space<vmem>>, vector<8x32xbf16>
    %cst_18 = arith.constant dense<0.000000e+00> : vector<10x32xf32>
    %18 = tpu.matmul %16, %17, %cst_18 {dimension_numbers = #tpu.dot_dimension_numbers<[1], [0], [0], [1], [0, 0, 1, 1], [], []>} : vector<10x8xbf16>, vector<8x32xbf16>, vector<10x32xf32> -> vector<10x32xf32>
    %19 = arith.truncf %18 : vector<10x32xf32> to vector<10x32xbf16>
    %cst_19 = arith.constant dense<0.000000e+00> : vector<10x32xf32>
    %20 = tpu.matmul %15, %19, %cst_19 {dimension_numbers = #tpu.dot_dimension_numbers<[1], [0], [0], [1], [0, 0, 1, 1], [], []>} : vector<10x10xbf16>, vector<10x32xbf16>, vector<10x32xf32> -> vector<10x32xf32>
    %cst_20 = arith.constant 0.000000e+00 : f32
    %21 = vector.broadcast %cst_20 : f32 to vector<10x32xf32>
    %22 = arith.maximumf %20, %21 : vector<10x32xf32>
    %23 = arith.truncf %22 : vector<10x32xf32> to vector<10x32xbf16>
    %c0_21 = arith.constant 0 : index
    %c0_22 = arith.constant 0 : index
    %24 = vector.load %arg9[%c0_21, %c0_22] : memref<32x16xbf16, #tpu.memory_space<vmem>>, vector<32x16xbf16>
    %cst_23 = arith.constant dense<0.000000e+00> : vector<10x16xf32>
    %25 = tpu.matmul %23, %24, %cst_23 {dimension_numbers = #tpu.dot_dimension_numbers<[1], [0], [0], [1], [0, 0, 1, 1], [], []>} : vector<10x32xbf16>, vector<32x16xbf16>, vector<10x16xf32> -> vector<10x16xf32>
    %26 = arith.truncf %25 : vector<10x16xf32> to vector<10x16xbf16>
    %cst_24 = arith.constant dense<0.000000e+00> : vector<10x16xf32>
    %27 = tpu.matmul %15, %26, %cst_24 {dimension_numbers = #tpu.dot_dimension_numbers<[1], [0], [0], [1], [0, 0, 1, 1], [], []>} : vector<10x10xbf16>, vector<10x16xbf16>, vector<10x16xf32> -> vector<10x16xf32>
    %cst_25 = arith.constant 0.000000e+00 : f32
    %28 = vector.broadcast %cst_25 : f32 to vector<10x16xf32>
    %29 = arith.maximumf %27, %28 : vector<10x16xf32>
    %c0_26 = arith.constant 0 : index
    %c0_27 = arith.constant 0 : index
    %30 = vector.load %arg11[%c0_26, %c0_27] : memref<16x8xbf16, #tpu.memory_space<vmem>>, vector<16x8xbf16>
    %c0_28 = arith.constant 0 : index
    %c0_29 = arith.constant 0 : index
    %c0_30 = arith.constant 0 : index
    %31 = vector.load %arg10[%c0_28, %c0_29, %c0_30] : memref<3x16x16xbf16, #tpu.memory_space<vmem>>, vector<1x16x16xbf16>
    %32 = vector.shape_cast %31 : vector<1x16x16xbf16> to vector<16x16xbf16>
    %cst_31 = arith.constant dense<0.000000e+00> : vector<16x8xf32>
    %33 = tpu.matmul %32, %30, %cst_31 {dimension_numbers = #tpu.dot_dimension_numbers<[1], [0], [0], [1], [0, 0, 1, 1], [], []>} : vector<16x16xbf16>, vector<16x8xbf16>, vector<16x8xf32> -> vector<16x8xf32>
    %c1 = arith.constant 1 : index
    %c0_32 = arith.constant 0 : index
    %c0_33 = arith.constant 0 : index
    %34 = vector.load %arg10[%c1, %c0_32, %c0_33] : memref<3x16x16xbf16, #tpu.memory_space<vmem>>, vector<1x16x16xbf16>
    %35 = vector.shape_cast %34 : vector<1x16x16xbf16> to vector<16x16xbf16>
    %cst_34 = arith.constant dense<0.000000e+00> : vector<16x8xf32>
    %36 = tpu.matmul %35, %30, %cst_34 {dimension_numbers = #tpu.dot_dimension_numbers<[1], [0], [0], [1], [0, 0, 1, 1], [], []>} : vector<16x16xbf16>, vector<16x8xbf16>, vector<16x8xf32> -> vector<16x8xf32>
    %c2 = arith.constant 2 : index
    %c0_35 = arith.constant 0 : index
    %c0_36 = arith.constant 0 : index
    %37 = vector.load %arg10[%c2, %c0_35, %c0_36] : memref<3x16x16xbf16, #tpu.memory_space<vmem>>, vector<1x16x16xbf16>
    %38 = vector.shape_cast %37 : vector<1x16x16xbf16> to vector<16x16xbf16>
    %cst_37 = arith.constant dense<0.000000e+00> : vector<16x8xf32>
    %39 = tpu.matmul %38, %30, %cst_37 {dimension_numbers = #tpu.dot_dimension_numbers<[1], [0], [0], [1], [0, 0, 1, 1], [], []>} : vector<16x16xbf16>, vector<16x8xbf16>, vector<16x8xf32> -> vector<16x8xf32>
    %40 = tpu.concatenate %33, %36, %39 in 1 : vector<16x8xf32>, vector<16x8xf32>, vector<16x8xf32> -> vector<16x24xf32>
    %41 = arith.truncf %40 : vector<16x24xf32> to vector<16x24xbf16>
    %c0_38 = arith.constant 0 : index
    %c0_39 = arith.constant 0 : index
    %42 = vector.load %arg14[%c0_38, %c0_39] : memref<24x32xbf16, #tpu.memory_space<vmem>>, vector<24x32xbf16>
    %cst_40 = arith.constant dense<0.000000e+00> : vector<16x32xf32>
    %43 = tpu.matmul %41, %42, %cst_40 {dimension_numbers = #tpu.dot_dimension_numbers<[1], [0], [0], [1], [0, 0, 1, 1], [], []>} : vector<16x24xbf16>, vector<24x32xbf16>, vector<16x32xf32> -> vector<16x32xf32>
    %cst_41 = arith.constant 0.000000e+00 : f32
    %44 = vector.broadcast %cst_41 : f32 to vector<16x32xf32>
    %45 = arith.maximumf %43, %44 : vector<16x32xf32>
    %46 = arith.truncf %45 : vector<16x32xf32> to vector<16x32xbf16>
    %c0_42 = arith.constant 0 : index
    %c0_43 = arith.constant 0 : index
    %c0_44 = arith.constant 0 : index
    %47 = vector.load %arg10[%c0_42, %c0_43, %c0_44] : memref<3x16x16xbf16, #tpu.memory_space<vmem>>, vector<1x16x16xbf16>
    %48 = vector.shape_cast %47 : vector<1x16x16xbf16> to vector<16x16xbf16>
    %cst_45 = arith.constant dense<0.000000e+00> : vector<16x32xf32>
    %49 = tpu.matmul %48, %46, %cst_45 {dimension_numbers = #tpu.dot_dimension_numbers<[1], [0], [0], [1], [0, 0, 1, 1], [], []>} : vector<16x16xbf16>, vector<16x32xbf16>, vector<16x32xf32> -> vector<16x32xf32>
    %c1_46 = arith.constant 1 : index
    %c0_47 = arith.constant 0 : index
    %c0_48 = arith.constant 0 : index
    %50 = vector.load %arg10[%c1_46, %c0_47, %c0_48] : memref<3x16x16xbf16, #tpu.memory_space<vmem>>, vector<1x16x16xbf16>
    %51 = vector.shape_cast %50 : vector<1x16x16xbf16> to vector<16x16xbf16>
    %cst_49 = arith.constant dense<0.000000e+00> : vector<16x32xf32>
    %52 = tpu.matmul %51, %46, %cst_49 {dimension_numbers = #tpu.dot_dimension_numbers<[1], [0], [0], [1], [0, 0, 1, 1], [], []>} : vector<16x16xbf16>, vector<16x32xbf16>, vector<16x32xf32> -> vector<16x32xf32>
    %c2_50 = arith.constant 2 : index
    %c0_51 = arith.constant 0 : index
    %c0_52 = arith.constant 0 : index
    %53 = vector.load %arg10[%c2_50, %c0_51, %c0_52] : memref<3x16x16xbf16, #tpu.memory_space<vmem>>, vector<1x16x16xbf16>
    %54 = vector.shape_cast %53 : vector<1x16x16xbf16> to vector<16x16xbf16>
    %cst_53 = arith.constant dense<0.000000e+00> : vector<16x32xf32>
    %55 = tpu.matmul %54, %46, %cst_53 {dimension_numbers = #tpu.dot_dimension_numbers<[1], [0], [0], [1], [0, 0, 1, 1], [], []>} : vector<16x16xbf16>, vector<16x32xbf16>, vector<16x32xf32> -> vector<16x32xf32>
    %56 = tpu.concatenate %49, %52, %55 in 1 : vector<16x32xf32>, vector<16x32xf32>, vector<16x32xf32> -> vector<16x96xf32>
    %57 = arith.truncf %56 : vector<16x96xf32> to vector<16x96xbf16>
    %c0_54 = arith.constant 0 : index
    %c0_55 = arith.constant 0 : index
    %58 = vector.load %arg15[%c0_54, %c0_55] : memref<96x16xbf16, #tpu.memory_space<vmem>>, vector<96x16xbf16>
    %cst_56 = arith.constant dense<0.000000e+00> : vector<16x16xf32>
    %59 = tpu.matmul %57, %58, %cst_56 {dimension_numbers = #tpu.dot_dimension_numbers<[1], [0], [0], [1], [0, 0, 1, 1], [], []>} : vector<16x96xbf16>, vector<96x16xbf16>, vector<16x16xf32> -> vector<16x16xf32>
    %cst_57 = arith.constant 0.000000e+00 : f32
    %60 = vector.broadcast %cst_57 : f32 to vector<16x16xf32>
    %61 = arith.maximumf %59, %60 : vector<16x16xf32>
    %c0_58 = arith.constant 0 : index
    %c0_59 = arith.constant 0 : index
    %62 = vector.load %arg2[%c0_58, %c0_59] : memref<2x12xf32, #tpu.memory_space<vmem>>, vector<2x12xf32>
    %cst_60 = arith.constant dense<0.000000e+00> : vector<2x16xf32>
    %63 = tpu.matmul %62, %14, %cst_60 {dimension_numbers = #tpu.dot_dimension_numbers<[1], [0], [0], [1], [0, 0, 1, 1], [], []>} : vector<2x12xf32>, vector<12x16xf32>, vector<2x16xf32> -> vector<2x16xf32>
    %c0_61 = arith.constant 0 : index
    %c0_62 = arith.constant 0 : index
    %64 = vector.load %arg7[%c0_61, %c0_62] : memref<2x10xf32, #tpu.memory_space<vmem>>, vector<2x10xf32>
    %cst_63 = arith.constant dense<0.000000e+00> : vector<2x16xf32>
    %65 = tpu.matmul %64, %29, %cst_63 {dimension_numbers = #tpu.dot_dimension_numbers<[1], [0], [0], [1], [0, 0, 1, 1], [], []>} : vector<2x10xf32>, vector<10x16xf32>, vector<2x16xf32> -> vector<2x16xf32>
    %c0_64 = arith.constant 0 : index
    %c0_65 = arith.constant 0 : index
    %66 = vector.load %arg12[%c0_64, %c0_65] : memref<2x16xf32, #tpu.memory_space<vmem>>, vector<2x16xf32>
    %cst_66 = arith.constant dense<0.000000e+00> : vector<2x16xf32>
    %67 = tpu.matmul %66, %61, %cst_66 {dimension_numbers = #tpu.dot_dimension_numbers<[1], [0], [0], [1], [0, 0, 1, 1], [], []>} : vector<2x16xf32>, vector<16x16xf32>, vector<2x16xf32> -> vector<2x16xf32>
    %c0_67 = arith.constant 0 : index
    %c0_68 = arith.constant 0 : index
    %68 = vector.load %arg13[%c0_67, %c0_68] : memref<2x16xf32, #tpu.memory_space<vmem>>, vector<2x16xf32>
    %cst_69 = arith.constant dense<0.000000e+00> : vector<2x16xf32>
    %69 = tpu.matmul %68, %61, %cst_69 {dimension_numbers = #tpu.dot_dimension_numbers<[1], [0], [0], [1], [0, 0, 1, 1], [], []>} : vector<2x16xf32>, vector<16x16xf32>, vector<2x16xf32> -> vector<2x16xf32>
    %70 = tpu.concatenate %63, %65, %67, %69 in 1 : vector<2x16xf32>, vector<2x16xf32>, vector<2x16xf32>, vector<2x16xf32> -> vector<2x64xf32>
    %c0_70 = arith.constant 0 : index
    %c0_71 = arith.constant 0 : index
    %71 = vector.load %arg16[%c0_70, %c0_71] : memref<64x64xf32, #tpu.memory_space<vmem>>, vector<64x64xf32>
    %cst_72 = arith.constant dense<0.000000e+00> : vector<2x64xf32>
    %72 = tpu.matmul %70, %71, %cst_72 {dimension_numbers = #tpu.dot_dimension_numbers<[1], [0], [0], [1], [0, 0, 1, 1], [], []>} : vector<2x64xf32>, vector<64x64xf32>, vector<2x64xf32> -> vector<2x64xf32>
    %c0_73 = arith.constant 0 : index
    %c0_74 = arith.constant 0 : index
    %73 = vector.load %arg17[%c0_73, %c0_74] : memref<1x64xf32, #tpu.memory_space<vmem>>, vector<1x64xf32>
    %74 = vector.broadcast %73 : vector<1x64xf32> to vector<2x64xf32>
    %75 = arith.addf %72, %74 : vector<2x64xf32>
    %cst_75 = arith.constant 0.000000e+00 : f32
    %76 = vector.broadcast %cst_75 : f32 to vector<2x64xf32>
    %77 = arith.maximumf %75, %76 : vector<2x64xf32>
    %c0_76 = arith.constant 0 : index
    %c0_77 = arith.constant 0 : index
    %78 = vector.load %arg18[%c0_76, %c0_77] : memref<64x32xf32, #tpu.memory_space<vmem>>, vector<64x32xf32>
    %cst_78 = arith.constant dense<0.000000e+00> : vector<2x32xf32>
    %79 = tpu.matmul %77, %78, %cst_78 {dimension_numbers = #tpu.dot_dimension_numbers<[1], [0], [0], [1], [0, 0, 1, 1], [], []>} : vector<2x64xf32>, vector<64x32xf32>, vector<2x32xf32> -> vector<2x32xf32>
    %c0_79 = arith.constant 0 : index
    %c0_80 = arith.constant 0 : index
    %80 = vector.load %arg19[%c0_79, %c0_80] : memref<1x32xf32, #tpu.memory_space<vmem>>, vector<1x32xf32>
    %81 = vector.broadcast %80 : vector<1x32xf32> to vector<2x32xf32>
    %82 = arith.addf %79, %81 : vector<2x32xf32>
    %cst_81 = arith.constant 0.000000e+00 : f32
    %83 = vector.broadcast %cst_81 : f32 to vector<2x32xf32>
    %84 = arith.maximumf %82, %83 : vector<2x32xf32>
    %c0_82 = arith.constant 0 : index
    %c0_83 = arith.constant 0 : index
    %85 = vector.load %arg20[%c0_82, %c0_83] : memref<32x1xf32, #tpu.memory_space<vmem>>, vector<32x1xf32>
    %cst_84 = arith.constant dense<0.000000e+00> : vector<2x1xf32>
    %86 = tpu.matmul %84, %85, %cst_84 {dimension_numbers = #tpu.dot_dimension_numbers<[1], [0], [0], [1], [0, 0, 1, 1], [], []>} : vector<2x32xf32>, vector<32x1xf32>, vector<2x1xf32> -> vector<2x1xf32>
    %c0_85 = arith.constant 0 : index
    %c0_86 = arith.constant 0 : index
    %87 = vector.load %arg21[%c0_85, %c0_86] : memref<1x1xf32, #tpu.memory_space<vmem>>, vector<1x1xf32>
    %88 = vector.broadcast %87 : vector<1x1xf32> to vector<2x1xf32>
    %89 = arith.addf %86, %88 : vector<2x1xf32>
    %c0_87 = arith.constant 0 : index
    %c0_88 = arith.constant 0 : index
    %90 = vector.load %arg22[%c0_87, %c0_88] : memref<2x1xf32, #tpu.memory_space<vmem>>, vector<2x1xf32>
    tpu.vector_store %arg22[%c0_87, %c0_88], %89 {strides = array<i32>} : memref<2x1xf32, #tpu.memory_space<vmem>>, vector<2x1xf32>,
    return
  }
}

</mosaic_0001>

<llo_original>
// kernel: tpu_custom_call.1
$region0: #{tpu_custom_call.1}
  #allocation0 [shape = 'u32[]', space=smem, size = 0x4, offset = 0x4, fixed_abs, tag = 'smem constant byte address 0x4 - core index']
  #allocation1 [shape = 'u32[144,128]{1,0:T(1,128)}', space=vmem, size = 0x12000, scoped, tag = 'internal scratch']
  #allocation2 [shape = 'f32[1,1]{1,0:T(1,128)S(1)}', space=vmem, size = 0x200, scoped, tag = 'scoped memory for tpu_custom_call.1']
  %s0 = inlined_call_operand.vmem [shape: bf16[12,12], index: 0, kind: input, shape index: {}]
  %s1 = inlined_call_operand.vmem [shape: bf16[12,8], index: 1, kind: input, shape index: {}]
  %s2 = inlined_call_operand.vmem [shape: f32[2,12], index: 2, kind: input, shape index: {}]
  %s3 = inlined_call_operand.vmem [shape: bf16[8,32], index: 3, kind: input, shape index: {}]
  %s4 = inlined_call_operand.vmem [shape: bf16[32,16], index: 4, kind: input, shape index: {}]
  %s5 = inlined_call_operand.vmem [shape: bf16[10,10], index: 5, kind: input, shape index: {}]
  %s6 = inlined_call_operand.vmem [shape: bf16[10,8], index: 6, kind: input, shape index: {}]
  %s7 = inlined_call_operand.vmem [shape: f32[2,10], index: 7, kind: input, shape index: {}]
  %s8 = inlined_call_operand.vmem [shape: bf16[8,32], index: 8, kind: input, shape index: {}]
  %s9 = inlined_call_operand.vmem [shape: bf16[32,16], index: 9, kind: input, shape index: {}]
  %s10 = inlined_call_operand.vmem [shape: bf16[3,16,16], index: 10, kind: input, shape index: {}]
  %s11 = inlined_call_operand.vmem [shape: bf16[16,8], index: 11, kind: input, shape index: {}]
  %s12 = inlined_call_operand.vmem [shape: f32[2,16], index: 12, kind: input, shape index: {}]
  %s13 = inlined_call_operand.vmem [shape: f32[2,16], index: 13, kind: input, shape index: {}]
  %s14 = inlined_call_operand.vmem [shape: bf16[24,32], index: 14, kind: input, shape index: {}]
  %s15 = inlined_call_operand.vmem [shape: bf16[96,16], index: 15, kind: input, shape index: {}]
  %s16 = inlined_call_operand.vmem [shape: f32[64,64], index: 16, kind: input, shape index: {}]
  %s17 = inlined_call_operand.vmem [shape: f32[1,64], index: 17, kind: input, shape index: {}]
  %s18 = inlined_call_operand.vmem [shape: f32[64,32], index: 18, kind: input, shape index: {}]
  %s19 = inlined_call_operand.vmem [shape: f32[1,32], index: 19, kind: input, shape index: {}]
  %s20 = inlined_call_operand.vmem [shape: f32[32,1], index: 20, kind: input, shape index: {}]
  %s21 = inlined_call_operand.<no memory space> [shape: f32[1,1], index: 21, kind: input, shape index: {}]
  %s22 = inlined_call_operand.vmem [shape: f32[2,1], index: 22, kind: output, shape index: {}]
  %s23 = sld [smem:[#allocation0]]
  $region98: #{tpu_custom_call.1} parent=0
    _
  %s25 = ssub.s32 1, %s23
  %s26 = scalar_select 0, %s25, %s23
  %v27 = vstv %s21
  %28 = vst [vmem:[#allocation2] sm:$0x1] %v27
  // Predicated region
  $region2: #{tpu_custom_call.1} parent=0 // pred_check
    _
  $region3: #{tpu_custom_call.1} parent=0 // pred_check_branch
    %30 = sbr.rel (0) target = $region5
  $region4: #{tpu_custom_call.1} parent=0 // pred_region
    _
  $region5: #{tpu_custom_call.1} parent=0 // pred_fallthru
    _
  // Predicated region
  $region6: #{tpu_custom_call.1} parent=0 // pred_check
    _
  $region7: #{tpu_custom_call.1} parent=0 // pred_check_branch
    %32 = sbr.rel (0) target = $region9
  $region8: #{tpu_custom_call.1} parent=0 // pred_region
    _
  $region9: #{tpu_custom_call.1} parent=0 // pred_fallthru
    _
  // Predicated region
  $region10: #{tpu_custom_call.1} parent=0 // pred_check
    _
  $region11: #{tpu_custom_call.1} parent=0 // pred_check_branch
    %34 = sbr.rel (0) target = $region13
  $region12: #{tpu_custom_call.1} parent=0 // pred_region
    _
  $region13: #{tpu_custom_call.1} parent=0 // pred_fallthru
    _
  // Predicated region
  $region14: #{tpu_custom_call.1} parent=0 // pred_check
    _
  $region15: #{tpu_custom_call.1} parent=0 // pred_check_branch
    %36 = sbr.rel (0) target = $region17
  $region16: #{tpu_custom_call.1} parent=0 // pred_region
    _
  $region17: #{tpu_custom_call.1} parent=0 // pred_fallthru
    _
  // Predicated region
  $region18: #{tpu_custom_call.1} parent=0 // pred_check
    _
  $region19: #{tpu_custom_call.1} parent=0 // pred_check_branch
    %38 = sbr.rel (0) target = $region21
  $region20: #{tpu_custom_call.1} parent=0 // pred_region
    _
  $region21: #{tpu_custom_call.1} parent=0 // pred_fallthru
    _
  // Predicated region
  $region22: #{tpu_custom_call.1} parent=0 // pred_check
    _
  $region23: #{tpu_custom_call.1} parent=0 // pred_check_branch
    %40 = sbr.rel (0) target = $region25
  $region24: #{tpu_custom_call.1} parent=0 // pred_region
    _
  $region25: #{tpu_custom_call.1} parent=0 // pred_fallthru
    _
  // Predicated region
  $region26: #{tpu_custom_call.1} parent=0 // pred_check
    _
  $region27: #{tpu_custom_call.1} parent=0 // pred_check_branch
    %42 = sbr.rel (0) target = $region29
  $region28: #{tpu_custom_call.1} parent=0 // pred_region
    _
  $region29: #{tpu_custom_call.1} parent=0 // pred_fallthru
    _
  // Predicated region
  $region30: #{tpu_custom_call.1} parent=0 // pred_check
    _
  $region31: #{tpu_custom_call.1} parent=0 // pred_check_branch
    %44 = sbr.rel (0) target = $region33
  $region32: #{tpu_custom_call.1} parent=0 // pred_region
    _
  $region33: #{tpu_custom_call.1} parent=0 // pred_fallthru
    _
  // Predicated region
  $region34: #{tpu_custom_call.1} parent=0 // pred_check
    _
  $region35: #{tpu_custom_call.1} parent=0 // pred_check_branch
    %46 = sbr.rel (0) target = $region37
  $region36: #{tpu_custom_call.1} parent=0 // pred_region
    _
  $region37: #{tpu_custom_call.1} parent=0 // pred_fallthru
    _
  // Predicated region
  $region38: #{tpu_custom_call.1} parent=0 // pred_check
    _
  $region39: #{tpu_custom_call.1} parent=0 // pred_check_branch
    %48 = sbr.rel (0) target = $region41
  $region40: #{tpu_custom_call.1} parent=0 // pred_region
    _
  $region41: #{tpu_custom_call.1} parent=0 // pred_fallthru
    _
  // Predicated region
  $region42: #{tpu_custom_call.1} parent=0 // pred_check
    _
  $region43: #{tpu_custom_call.1} parent=0 // pred_check_branch
    %50 = sbr.rel (0) target = $region45
  $region44: #{tpu_custom_call.1} parent=0 // pred_region
    _
  $region45: #{tpu_custom_call.1} parent=0 // pred_fallthru
    _
  // Predicated region
  $region46: #{tpu_custom_call.1} parent=0 // pred_check
    _
  $region47: #{tpu_custom_call.1} parent=0 // pred_check_branch
    %52 = sbr.rel (0) target = $region49
  $region48: #{tpu_custom_call.1} parent=0 // pred_region
    _
  $region49: #{tpu_custom_call.1} parent=0 // pred_fallthru
    _
  // Predicated region
  $region50: #{tpu_custom_call.1} parent=0 // pred_check
    _
  $region51: #{tpu_custom_call.1} parent=0 // pred_check_branch
    %54 = sbr.rel (0) target = $region53
  $region52: #{tpu_custom_call.1} parent=0 // pred_region
    _
  $region53: #{tpu_custom_call.1} parent=0 // pred_fallthru
    _
  // Predicated region
  $region54: #{tpu_custom_call.1} parent=0 // pred_check
    _
  $region55: #{tpu_custom_call.1} parent=0 // pred_check_branch
    %56 = sbr.rel (0) target = $region57
  $region56: #{tpu_custom_call.1} parent=0 // pred_region
    _
  $region57: #{tpu_custom_call.1} parent=0 // pred_fallthru
    _
  // Predicated region
  $region58: #{tpu_custom_call.1} parent=0 // pred_check
    _
  $region59: #{tpu_custom_call.1} parent=0 // pred_check_branch
    %58 = sbr.rel (0) target = $region61
  $region60: #{tpu_custom_call.1} parent=0 // pred_region
    _
  $region61: #{tpu_custom_call.1} parent=0 // pred_fallthru
    _
  // Predicated region
  $region62: #{tpu_custom_call.1} parent=0 // pred_check
    _
  $region63: #{tpu_custom_call.1} parent=0 // pred_check_branch
    %60 = sbr.rel (0) target = $region65
  $region64: #{tpu_custom_call.1} parent=0 // pred_region
    _
  $region65: #{tpu_custom_call.1} parent=0 // pred_fallthru
    _
  // Predicated region
  $region66: #{tpu_custom_call.1} parent=0 // pred_check
    _
  $region67: #{tpu_custom_call.1} parent=0 // pred_check_branch
    %62 = sbr.rel (0) target = $region69
  $region68: #{tpu_custom_call.1} parent=0 // pred_region
    _
  $region69: #{tpu_custom_call.1} parent=0 // pred_fallthru
    _
  // Predicated region
  $region70: #{tpu_custom_call.1} parent=0 // pred_check
    _
  $region71: #{tpu_custom_call.1} parent=0 // pred_check_branch
    %64 = sbr.rel (0) target = $region73
  $region72: #{tpu_custom_call.1} parent=0 // pred_region
    _
  $region73: #{tpu_custom_call.1} parent=0 // pred_fallthru
    _
  // Predicated region
  $region74: #{tpu_custom_call.1} parent=0 // pred_check
    _
  $region75: #{tpu_custom_call.1} parent=0 // pred_check_branch
    %66 = sbr.rel (0) target = $region77
  $region76: #{tpu_custom_call.1} parent=0 // pred_region
    _
  $region77: #{tpu_custom_call.1} parent=0 // pred_fallthru
    _
  // Predicated region
  $region78: #{tpu_custom_call.1} parent=0 // pred_check
    _
  $region79: #{tpu_custom_call.1} parent=0 // pred_check_branch
    %68 = sbr.rel (0) target = $region81
  $region80: #{tpu_custom_call.1} parent=0 // pred_region
    _
  $region81: #{tpu_custom_call.1} parent=0 // pred_fallthru
    _
  // Predicated region
  $region82: #{tpu_custom_call.1} parent=0 // pred_check
    _
  $region83: #{tpu_custom_call.1} parent=0 // pred_check_branch
    %70 = sbr.rel (0) target = $region85
  $region84: #{tpu_custom_call.1} parent=0 // pred_region
    _
  $region85: #{tpu_custom_call.1} parent=0 // pred_fallthru
    _
  // Predicated region
  $region86: #{tpu_custom_call.1} parent=0 // pred_check
    _
  $region87: #{tpu_custom_call.1} parent=0 // pred_check_branch
    %72 = sbr.rel (0) target = $region89
  $region88: #{tpu_custom_call.1} parent=0 // pred_region
    _
  $region89: #{tpu_custom_call.1} parent=0 // pred_fallthru
    _
  %v74 = vld [vmem:[%s0] sm:$0xf]
  %v75 = vld [vmem:[%s0 + $0x4] sm:$0x3]
  %v76 = vld [vmem:[%s1] sm:$0xf]
  %v77 = vld [vmem:[%s1 + $0x4] sm:$0x3]
  %v78 = vld [vmem:[%s3] sm:$0xf]
  %v81 = vunpack.c.l.b16 %v76
  %v82 = vunpack.c.l.b16 %v77
  %v83 = vpack.c.b16 %v82, %v81
  %vm84 = vcmask 64512
  %v86 = vsel %vm84, %v83, 0
  %vm88 = vcmask 1043456
  %v90 = vsel %vm88, %v78, 0
  %92 = vmatprep.subr.bf16.mxu0 0
  %93 = vmatpush1.bf16.msra.mxu0 %v90
  %94 = vmatprep.subr.bf16.mxu0 0
  %95 = vmatpush1.bf16.msra.mxu0 0
  %96 = vmatprep.subr.bf16.mxu0 0
  %97 = vmatpush1.bf16.msra.mxu0 0
  %98 = vmatprep.subr.bf16.mxu0 0
  %99 = vmatpush1.bf16.msra.mxu0 0
  %100 = vmatprep.subr.bf16.mxu0 0
  %101 = vmatpush1.bf16.msra.mxu0 0
  %102 = vmatprep.subr.bf16.mxu0 0
  %103 = vmatpush1.bf16.msra.mxu0 0
  %104 = vmatprep.subr.bf16.mxu0 0
  %105 = vmatpush1.bf16.msra.mxu0 0
  %106 = vmatprep.subr.bf16.mxu0 0
  %107 = vmatpush1.bf16.msra.mxu0 0
  %108 = vmatprep.subr.bf16.mxu0 0
  %109 = vmatpush1.bf16.msra.mxu0 0
  %110 = vmatprep.subr.bf16.mxu0 0
  %111 = vmatpush1.bf16.msra.mxu0 0
  %112 = vmatprep.subr.bf16.mxu0 0
  %113 = vmatpush1.bf16.msra.mxu0 0
  %114 = vmatprep.subr.bf16.mxu0 0
  %115 = vmatpush1.bf16.msra.mxu0 0
  %116 = vmatprep.subr.bf16.mxu0 0
  %117 = vmatpush1.bf16.msra.mxu0 0
  %118 = vmatprep.subr.bf16.mxu0 0
  %119 = vmatpush1.bf16.msra.mxu0 0
  %120 = vmatprep.subr.bf16.mxu0 0
  %121 = vmatpush1.bf16.msra.mxu0 0
  %122 = vmatprep.subr.bf16.mxu0 0
  %123 = vmatpush1.bf16.msra.mxu0 0
  %124 = vmatprep.mubr.bf16.mxu0 0
  %125 = vmatmul.mubr.bf16.gmra.mrb[0].mxu0 %v86
  %v126 = vpop.f32.mrb[0].mxu0
  %v127 = vadd.f32 0.0, %v126
  %v128 = vpop.f32.mrb[0].mxu0
  %v129 = vpop.f32.mrb[0].mxu0
  %v130 = vadd.f32 0.0, %v129
  %v131 = vpop.f32.mrb[0].mxu0
  %132 = vdwg.mxu0
  %v133 = vpack.c.bf16 %v130, %v127
  %v136 = vunpack.c.l.b16 %v74
  %v137 = vunpack.c.l.b16 %v75
  %v138 = vpack.c.b16 %v137, %v136
  %vm139 = vcmask 97280
  %v141 = vsel %vm139, %v138, 0
  %vm143 = vcmask 1045504
  %v145 = vsel %vm143, %v133, 0
  %147 = vmatprep.subr.bf16.mxu0 0
  %148 = vmatpush1.bf16.msra.mxu0 %v145
  %149 = vmatprep.subr.bf16.mxu0 0
  %150 = vmatpush1.bf16.msra.mxu0 0
  %151 = vmatprep.subr.bf16.mxu0 0
  %152 = vmatpush1.bf16.msra.mxu0 0
  %153 = vmatprep.subr.bf16.mxu0 0
  %154 = vmatpush1.bf16.msra.mxu0 0
  %155 = vmatprep.subr.bf16.mxu0 0
  %156 = vmatpush1.bf16.msra.mxu0 0
  %157 = vmatprep.subr.bf16.mxu0 0
  %158 = vmatpush1.bf16.msra.mxu0 0
  %159 = vmatprep.subr.bf16.mxu0 0
  %160 = vmatpush1.bf16.msra.mxu0 0
  %161 = vmatprep.subr.bf16.mxu0 0
  %162 = vmatpush1.bf16.msra.mxu0 0
  %163 = vmatprep.subr.bf16.mxu0 0
  %164 = vmatpush1.bf16.msra.mxu0 0
  %165 = vmatprep.subr.bf16.mxu0 0
  %166 = vmatpush1.bf16.msra.mxu0 0
  %167 = vmatprep.subr.bf16.mxu0 0
  %168 = vmatpush1.bf16.msra.mxu0 0
  %169 = vmatprep.subr.bf16.mxu0 0
  %170 = vmatpush1.bf16.msra.mxu0 0
  %171 = vmatprep.subr.bf16.mxu0 0
  %172 = vmatpush1.bf16.msra.mxu0 0
  %173 = vmatprep.subr.bf16.mxu0 0
  %174 = vmatpush1.bf16.msra.mxu0 0
  %175 = vmatprep.subr.bf16.mxu0 0
  %176 = vmatpush1.bf16.msra.mxu0 0
  %177 = vmatprep.subr.bf16.mxu0 0
  %178 = vmatpush1.bf16.msra.mxu0 0
  %179 = vmatprep.mubr.bf16.mxu0 0
  %180 = vmatmul.mubr.bf16.gmra.mrb[0].mxu0 %v141
  %v181 = vpop.f32.mrb[0].mxu0
  %v182 = vadd.f32 0.0, %v181
  %v183 = vpop.f32.mrb[0].mxu0
  %v184 = vpop.f32.mrb[0].mxu0
  %v185 = vadd.f32 0.0, %v184
  %v186 = vpop.f32.mrb[0].mxu0
  %187 = vdwg.mxu0
  %v188 = vmax.f32 %v182, 0.0
  %v189 = vmax.f32 %v185, 0.0
  %v190 = vpack.c.bf16 %v189, %v188
  %v191 = vld [vmem:[%s4] sm:$0xf]
  %v192 = vld [vmem:[%s4 + $0x4] sm:$0xf]
  %v193 = vld [vmem:[%s4 + $0x8] sm:$0xf]
  %v194 = vld [vmem:[%s4 + $0xc] sm:$0xf]
  %v199 = vunpack.c.l.b16 %v191
  %v200 = vunpack.c.l.b16 %v192
  %v201 = vunpack.c.l.b16 %v193
  %v202 = vunpack.c.l.b16 %v194
  %v203 = vpack.c.b16 %v200, %v199
  %v204 = vpack.c.b16 %v202, %v201
  %vm207 = vcmask 261120
  %v209 = vsel %vm207, %v190, 0
  %211 = vmatprep.subr.bf16.mxu0 0
  %212 = vmatpush1.bf16.msra.mxu0 %v203
  %213 = vmatprep.subr.bf16.mxu0 0
  %214 = vmatpush1.bf16.msra.mxu0 %v204
  %215 = vmatprep.subr.bf16.mxu0 0
  %216 = vmatpush1.bf16.msra.mxu0 0
  %217 = vmatprep.subr.bf16.mxu0 0
  %218 = vmatpush1.bf16.msra.mxu0 0
  %219 = vmatprep.subr.bf16.mxu0 0
  %220 = vmatpush1.bf16.msra.mxu0 0
  %221 = vmatprep.subr.bf16.mxu0 0
  %222 = vmatpush1.bf16.msra.mxu0 0
  %223 = vmatprep.subr.bf16.mxu0 0
  %224 = vmatpush1.bf16.msra.mxu0 0
  %225 = vmatprep.subr.bf16.mxu0 0
  %226 = vmatpush1.bf16.msra.mxu0 0
  %227 = vmatprep.subr.bf16.mxu0 0
  %228 = vmatpush1.bf16.msra.mxu0 0
  %229 = vmatprep.subr.bf16.mxu0 0
  %230 = vmatpush1.bf16.msra.mxu0 0
  %231 = vmatprep.subr.bf16.mxu0 0
  %232 = vmatpush1.bf16.msra.mxu0 0
  %233 = vmatprep.subr.bf16.mxu0 0
  %234 = vmatpush1.bf16.msra.mxu0 0
  %235 = vmatprep.subr.bf16.mxu0 0
  %236 = vmatpush1.bf16.msra.mxu0 0
  %237 = vmatprep.subr.bf16.mxu0 0
  %238 = vmatpush1.bf16.msra.mxu0 0
  %239 = vmatprep.subr.bf16.mxu0 0
  %240 = vmatpush1.bf16.msra.mxu0 0
  %241 = vmatprep.subr.bf16.mxu0 0
  %242 = vmatpush1.bf16.msra.mxu0 0
  %243 = vmatprep.mubr.bf16.mxu0 0
  %244 = vmatmul.mubr.bf16.gmra.mrb[0].mxu0 %v209
  %v245 = vpop.f32.mrb[0].mxu0
  %v246 = vadd.f32 0.0, %v245
  %v247 = vpop.f32.mrb[0].mxu0
  %v248 = vpop.f32.mrb[0].mxu0
  %v249 = vadd.f32 0.0, %v248
  %v250 = vpop.f32.mrb[0].mxu0
  %251 = vdwg.mxu0
  %v252 = vpack.c.bf16 %v249, %v246
  %v254 = vsel %vm143, %v252, 0
  %256 = vmatprep.subr.bf16.mxu0 0
  %257 = vmatpush1.bf16.msra.mxu0 %v254
  %258 = vmatprep.subr.bf16.mxu0 0
  %259 = vmatpush1.bf16.msra.mxu0 0
  %260 = vmatprep.subr.bf16.mxu0 0
  %261 = vmatpush1.bf16.msra.mxu0 0
  %262 = vmatprep.subr.bf16.mxu0 0
  %263 = vmatpush1.bf16.msra.mxu0 0
  %264 = vmatprep.subr.bf16.mxu0 0
  %265 = vmatpush1.bf16.msra.mxu0 0
  %266 = vmatprep.subr.bf16.mxu0 0
  %267 = vmatpush1.bf16.msra.mxu0 0
  %268 = vmatprep.subr.bf16.mxu0 0
  %269 = vmatpush1.bf16.msra.mxu0 0
  %270 = vmatprep.subr.bf16.mxu0 0
  %271 = vmatpush1.bf16.msra.mxu0 0
  %272 = vmatprep.subr.bf16.mxu0 0
  %273 = vmatpush1.bf16.msra.mxu0 0
  %274 = vmatprep.subr.bf16.mxu0 0
  %275 = vmatpush1.bf16.msra.mxu0 0
  %276 = vmatprep.subr.bf16.mxu0 0
  %277 = vmatpush1.bf16.msra.mxu0 0
  %278 = vmatprep.subr.bf16.mxu0 0
  %279 = vmatpush1.bf16.msra.mxu0 0
  %280 = vmatprep.subr.bf16.mxu0 0
  %281 = vmatpush1.bf16.msra.mxu0 0
  %282 = vmatprep.subr.bf16.mxu0 0
  %283 = vmatpush1.bf16.msra.mxu0 0
  %284 = vmatprep.subr.bf16.mxu0 0
  %285 = vmatpush1.bf16.msra.mxu0 0
  %286 = vmatprep.subr.bf16.mxu0 0
  %287 = vmatpush1.bf16.msra.mxu0 0
  %288 = vmatprep.mubr.bf16.mxu0 0
  %289 = vmatmul.mubr.bf16.gmra.mrb[0].mxu0 %v141
  %v290 = vpop.f32.mrb[0].mxu0
  %v291 = vadd.f32 0.0, %v290
  %v292 = vpop.f32.mrb[0].mxu0
  %v293 = vpop.f32.mrb[0].mxu0
  %v294 = vadd.f32 0.0, %v293
  %v295 = vpop.f32.mrb[0].mxu0
  %296 = vdwg.mxu0
  %v297 = vmax.f32 %v291, 0.0
  %v298 = vmax.f32 %v294, 0.0
  %v299 = vld [vmem:[%s5] sm:$0xf]
  %v300 = vld [vmem:[%s5 + $0x4] sm:$0x1]
  %v301 = vld [vmem:[%s6] sm:$0xf]
  %v302 = vld [vmem:[%s6 + $0x4] sm:$0x1]
  %v303 = vld [vmem:[%s8] sm:$0xf]
  %v306 = vunpack.c.l.b16 %v301
  %v307 = vunpack.c.l.b16 %v302
  %v308 = vpack.c.b16 %v307, %v306
  %v310 = vsel %vm84, %v308, 0
  %v313 = vsel %vm88, %v303, 0
  %315 = vmatprep.subr.bf16.mxu0 0
  %316 = vmatpush1.bf16.msra.mxu0 %v313
  %317 = vmatprep.subr.bf16.mxu0 0
  %318 = vmatpush1.bf16.msra.mxu0 0
  %319 = vmatprep.subr.bf16.mxu0 0
  %320 = vmatpush1.bf16.msra.mxu0 0
  %321 = vmatprep.subr.bf16.mxu0 0
  %322 = vmatpush1.bf16.msra.mxu0 0
  %323 = vmatprep.subr.bf16.mxu0 0
  %324 = vmatpush1.bf16.msra.mxu0 0
  %325 = vmatprep.subr.bf16.mxu0 0
  %326 = vmatpush1.bf16.msra.mxu0 0
  %327 = vmatprep.subr.bf16.mxu0 0
  %328 = vmatpush1.bf16.msra.mxu0 0
  %329 = vmatprep.subr.bf16.mxu0 0
  %330 = vmatpush1.bf16.msra.mxu0 0
  %331 = vmatprep.subr.bf16.mxu0 0
  %332 = vmatpush1.bf16.msra.mxu0 0
  %333 = vmatprep.subr.bf16.mxu0 0
  %334 = vmatpush1.bf16.msra.mxu0 0
  %335 = vmatprep.subr.bf16.mxu0 0
  %336 = vmatpush1.bf16.msra.mxu0 0
  %337 = vmatprep.subr.bf16.mxu0 0
  %338 = vmatpush1.bf16.msra.mxu0 0
  %339 = vmatprep.subr.bf16.mxu0 0
  %340 = vmatpush1.bf16.msra.mxu0 0
  %341 = vmatprep.subr.bf16.mxu0 0
  %342 = vmatpush1.bf16.msra.mxu0 0
  %343 = vmatprep.subr.bf16.mxu0 0
  %344 = vmatpush1.bf16.msra.mxu0 0
  %345 = vmatprep.subr.bf16.mxu0 0
  %346 = vmatpush1.bf16.msra.mxu0 0
  %347 = vmatprep.mubr.bf16.mxu0 0
  %348 = vmatmul.mubr.bf16.gmra.mrb[0].mxu0 %v310
  %v349 = vpop.f32.mrb[0].mxu0
  %v350 = vadd.f32 0.0, %v349
  %v351 = vpop.f32.mrb[0].mxu0
  %v352 = vpop.f32.mrb[0].mxu0
  %v353 = vadd.f32 0.0, %v352
  %v354 = vpop.f32.mrb[0].mxu0
  %355 = vdwg.mxu0
  %v356 = vpack.c.bf16 %v353, %v350
  %v359 = vunpack.c.l.b16 %v299
  %v360 = vunpack.c.l.b16 %v300
  %v361 = vpack.c.b16 %v360, %v359
  %vm362 = vcmask 80896
  %v364 = vsel %vm362, %v361, 0
  %vm366 = vcmask 1044480
  %v368 = vsel %vm366, %v356, 0
  %370 = vmatprep.subr.bf16.mxu0 0
  %371 = vmatpush1.bf16.msra.mxu0 %v368
  %372 = vmatprep.subr.bf16.mxu0 0
  %373 = vmatpush1.bf16.msra.mxu0 0
  %374 = vmatprep.subr.bf16.mxu0 0
  %375 = vmatpush1.bf16.msra.mxu0 0
  %376 = vmatprep.subr.bf16.mxu0 0
  %377 = vmatpush1.bf16.msra.mxu0 0
  %378 = vmatprep.subr.bf16.mxu0 0
  %379 = vmatpush1.bf16.msra.mxu0 0
  %380 = vmatprep.subr.bf16.mxu0 0
  %381 = vmatpush1.bf16.msra.mxu0 0
  %382 = vmatprep.subr.bf16.mxu0 0
  %383 = vmatpush1.bf16.msra.mxu0 0
  %384 = vmatprep.subr.bf16.mxu0 0
  %385 = vmatpush1.bf16.msra.mxu0 0
  %386 = vmatprep.subr.bf16.mxu0 0
  %387 = vmatpush1.bf16.msra.mxu0 0
  %388 = vmatprep.subr.bf16.mxu0 0
  %389 = vmatpush1.bf16.msra.mxu0 0
  %390 = vmatprep.subr.bf16.mxu0 0
  %391 = vmatpush1.bf16.msra.mxu0 0
  %392 = vmatprep.subr.bf16.mxu0 0
  %393 = vmatpush1.bf16.msra.mxu0 0
  %394 = vmatprep.subr.bf16.mxu0 0
  %395 = vmatpush1.bf16.msra.mxu0 0
  %396 = vmatprep.subr.bf16.mxu0 0
  %397 = vmatpush1.bf16.msra.mxu0 0
  %398 = vmatprep.subr.bf16.mxu0 0
  %399 = vmatpush1.bf16.msra.mxu0 0
  %400 = vmatprep.subr.bf16.mxu0 0
  %401 = vmatpush1.bf16.msra.mxu0 0
  %402 = vmatprep.mubr.bf16.mxu0 0
  %403 = vmatmul.mubr.bf16.gmra.mrb[0].mxu0 %v364
  %v404 = vpop.f32.mrb[0].mxu0
  %v405 = vadd.f32 0.0, %v404
  %v406 = vpop.f32.mrb[0].mxu0
  %v407 = vpop.f32.mrb[0].mxu0
  %v408 = vadd.f32 0.0, %v407
  %v409 = vpop.f32.mrb[0].mxu0
  %410 = vdwg.mxu0
  %v411 = vmax.f32 %v405, 0.0
  %v412 = vmax.f32 %v408, 0.0
  %v413 = vpack.c.bf16 %v412, %v411
  %v414 = vld [vmem:[%s9] sm:$0xf]
  %v415 = vld [vmem:[%s9 + $0x4] sm:$0xf]
  %v416 = vld [vmem:[%s9 + $0x8] sm:$0xf]
  %v417 = vld [vmem:[%s9 + $0xc] sm:$0xf]
  %v422 = vunpack.c.l.b16 %v414
  %v423 = vunpack.c.l.b16 %v415
  %v424 = vunpack.c.l.b16 %v416
  %v425 = vunpack.c.l.b16 %v417
  %v426 = vpack.c.b16 %v423, %v422
  %v427 = vpack.c.b16 %v425, %v424
  %v431 = vsel %vm207, %v413, 0
  %433 = vmatprep.subr.bf16.mxu0 0
  %434 = vmatpush1.bf16.msra.mxu0 %v426
  %435 = vmatprep.subr.bf16.mxu0 0
  %436 = vmatpush1.bf16.msra.mxu0 %v427
  %437 = vmatprep.subr.bf16.mxu0 0
  %438 = vmatpush1.bf16.msra.mxu0 0
  %439 = vmatprep.subr.bf16.mxu0 0
  %440 = vmatpush1.bf16.msra.mxu0 0
  %441 = vmatprep.subr.bf16.mxu0 0
  %442 = vmatpush1.bf16.msra.mxu0 0
  %443 = vmatprep.subr.bf16.mxu0 0
  %444 = vmatpush1.bf16.msra.mxu0 0
  %445 = vmatprep.subr.bf16.mxu0 0
  %446 = vmatpush1.bf16.msra.mxu0 0
  %447 = vmatprep.subr.bf16.mxu0 0
  %448 = vmatpush1.bf16.msra.mxu0 0
  %449 = vmatprep.subr.bf16.mxu0 0
  %450 = vmatpush1.bf16.msra.mxu0 0
  %451 = vmatprep.subr.bf16.mxu0 0
  %452 = vmatpush1.bf16.msra.mxu0 0
  %453 = vmatprep.subr.bf16.mxu0 0
  %454 = vmatpush1.bf16.msra.mxu0 0
  %455 = vmatprep.subr.bf16.mxu0 0
  %456 = vmatpush1.bf16.msra.mxu0 0
  %457 = vmatprep.subr.bf16.mxu0 0
  %458 = vmatpush1.bf16.msra.mxu0 0
  %459 = vmatprep.subr.bf16.mxu0 0
  %460 = vmatpush1.bf16.msra.mxu0 0
  %461 = vmatprep.subr.bf16.mxu0 0
  %462 = vmatpush1.bf16.msra.mxu0 0
  %463 = vmatprep.subr.bf16.mxu0 0
  %464 = vmatpush1.bf16.msra.mxu0 0
  %465 = vmatprep.mubr.bf16.mxu0 0
  %466 = vmatmul.mubr.bf16.gmra.mrb[0].mxu0 %v431
  %v467 = vpop.f32.mrb[0].mxu0
  %v468 = vadd.f32 0.0, %v467
  %v469 = vpop.f32.mrb[0].mxu0
  %v470 = vpop.f32.mrb[0].mxu0
  %v471 = vadd.f32 0.0, %v470
  %v472 = vpop.f32.mrb[0].mxu0
  %473 = vdwg.mxu0
  %v474 = vpack.c.bf16 %v471, %v468
  %v476 = vsel %vm366, %v474, 0
  %478 = vmatprep.subr.bf16.mxu0 0
  %479 = vmatpush1.bf16.msra.mxu0 %v476
  %480 = vmatprep.subr.bf16.mxu0 0
  %481 = vmatpush1.bf16.msra.mxu0 0
  %482 = vmatprep.subr.bf16.mxu0 0
  %483 = vmatpush1.bf16.msra.mxu0 0
  %484 = vmatprep.subr.bf16.mxu0 0
  %485 = vmatpush1.bf16.msra.mxu0 0
  %486 = vmatprep.subr.bf16.mxu0 0
  %487 = vmatpush1.bf16.msra.mxu0 0
  %488 = vmatprep.subr.bf16.mxu0 0
  %489 = vmatpush1.bf16.msra.mxu0 0
  %490 = vmatprep.subr.bf16.mxu0 0
  %491 = vmatpush1.bf16.msra.mxu0 0
  %492 = vmatprep.subr.bf16.mxu0 0
  %493 = vmatpush1.bf16.msra.mxu0 0
  %494 = vmatprep.subr.bf16.mxu0 0
  %495 = vmatpush1.bf16.msra.mxu0 0
  %496 = vmatprep.subr.bf16.mxu0 0
  %497 = vmatpush1.bf16.msra.mxu0 0
  %498 = vmatprep.subr.bf16.mxu0 0
  %499 = vmatpush1.bf16.msra.mxu0 0
  %500 = vmatprep.subr.bf16.mxu0 0
  %501 = vmatpush1.bf16.msra.mxu0 0
  %502 = vmatprep.subr.bf16.mxu0 0
  %503 = vmatpush1.bf16.msra.mxu0 0
  %504 = vmatprep.subr.bf16.mxu0 0
  %505 = vmatpush1.bf16.msra.mxu0 0
  %506 = vmatprep.subr.bf16.mxu0 0
  %507 = vmatpush1.bf16.msra.mxu0 0
  %508 = vmatprep.subr.bf16.mxu0 0
  %509 = vmatpush1.bf16.msra.mxu0 0
  %510 = vmatprep.mubr.bf16.mxu0 0
  %511 = vmatmul.mubr.bf16.gmra.mrb[0].mxu0 %v364
  %v512 = vpop.f32.mrb[0].mxu0
  %v513 = vadd.f32 0.0, %v512
  %v514 = vpop.f32.mrb[0].mxu0
  %v515 = vpop.f32.mrb[0].mxu0
  %v516 = vadd.f32 0.0, %v515
  %v517 = vpop.f32.mrb[0].mxu0
  %518 = vdwg.mxu0
  %v519 = vmax.f32 %v513, 0.0
  %v520 = vmax.f32 %v516, 0.0
  %v521 = vld [vmem:[%s11] sm:$0xf]
  %v522 = vld [vmem:[%s11 + $0x4] sm:$0xf]
  %v523 = vld [vmem:[%s10] sm:$0xf]
  %v524 = vld [vmem:[%s10 + $0x4] sm:$0xf]
  %v527 = vunpack.c.l.b16 %v523
  %v528 = vunpack.c.l.b16 %v524
  %v529 = vpack.c.b16 %v528, %v527
  %v532 = vunpack.c.l.b16 %v521
  %v533 = vunpack.c.l.b16 %v522
  %v534 = vpack.c.b16 %v533, %v532
  %vm536 = vcmask 130048
  %v538 = vsel %vm536, %v529, 0
  %540 = vmatprep.subr.bf16.mxu0 0
  %541 = vmatpush1.bf16.msra.mxu0 %v534
  %542 = vmatprep.subr.bf16.mxu0 0
  %543 = vmatpush1.bf16.msra.mxu0 0
  %544 = vmatprep.subr.bf16.mxu0 0
  %545 = vmatpush1.bf16.msra.mxu0 0
  %546 = vmatprep.subr.bf16.mxu0 0
  %547 = vmatpush1.bf16.msra.mxu0 0
  %548 = vmatprep.subr.bf16.mxu0 0
  %549 = vmatpush1.bf16.msra.mxu0 0
  %550 = vmatprep.subr.bf16.mxu0 0
  %551 = vmatpush1.bf16.msra.mxu0 0
  %552 = vmatprep.subr.bf16.mxu0 0
  %553 = vmatpush1.bf16.msra.mxu0 0
  %554 = vmatprep.subr.bf16.mxu0 0
  %555 = vmatpush1.bf16.msra.mxu0 0
  %556 = vmatprep.subr.bf16.mxu0 0
  %557 = vmatpush1.bf16.msra.mxu0 0
  %558 = vmatprep.subr.bf16.mxu0 0
  %559 = vmatpush1.bf16.msra.mxu0 0
  %560 = vmatprep.subr.bf16.mxu0 0
  %561 = vmatpush1.bf16.msra.mxu0 0
  %562 = vmatprep.subr.bf16.mxu0 0
  %563 = vmatpush1.bf16.msra.mxu0 0
  %564 = vmatprep.subr.bf16.mxu0 0
  %565 = vmatpush1.bf16.msra.mxu0 0
  %566 = vmatprep.subr.bf16.mxu0 0
  %567 = vmatpush1.bf16.msra.mxu0 0
  %568 = vmatprep.subr.bf16.mxu0 0
  %569 = vmatpush1.bf16.msra.mxu0 0
  %570 = vmatprep.subr.bf16.mxu0 0
  %571 = vmatpush1.bf16.msra.mxu0 0
  %572 = vmatprep.mubr.bf16.mxu0 0
  %573 = vmatmul.mubr.bf16.gmra.mrb[0].mxu0 %v538
  %v574 = vpop.f32.mrb[0].mxu0
  %v575 = vadd.f32 0.0, %v574
  %v576 = vpop.f32.mrb[0].mxu0
  %v577 = vpop.f32.mrb[0].mxu0
  %v578 = vadd.f32 0.0, %v577
  %v579 = vpop.f32.mrb[0].mxu0
  %580 = vdwg.mxu0
  %s581 = scalar_lea.vmem %s10, 8
  %v582 = vld [vmem:[%s581] sm:$0xf]
  %v583 = vld [vmem:[%s581 + $0x4] sm:$0xf]
  %v586 = vunpack.c.l.b16 %v582
  %v587 = vunpack.c.l.b16 %v583
  %v588 = vpack.c.b16 %v587, %v586
  %v590 = vsel %vm536, %v588, 0
  %592 = vmatprep.subr.bf16.mxu0 0
  %593 = vmatpush1.bf16.msra.mxu0 %v534
  %594 = vmatprep.subr.bf16.mxu0 0
  %595 = vmatpush1.bf16.msra.mxu0 0
  %596 = vmatprep.subr.bf16.mxu0 0
  %597 = vmatpush1.bf16.msra.mxu0 0
  %598 = vmatprep.subr.bf16.mxu0 0
  %599 = vmatpush1.bf16.msra.mxu0 0
  %600 = vmatprep.subr.bf16.mxu0 0
  %601 = vmatpush1.bf16.msra.mxu0 0
  %602 = vmatprep.subr.bf16.mxu0 0
  %603 = vmatpush1.bf16.msra.mxu0 0
  %604 = vmatprep.subr.bf16.mxu0 0
  %605 = vmatpush1.bf16.msra.mxu0 0
  %606 = vmatprep.subr.bf16.mxu0 0
  %607 = vmatpush1.bf16.msra.mxu0 0
  %608 = vmatprep.subr.bf16.mxu0 0
  %609 = vmatpush1.bf16.msra.mxu0 0
  %610 = vmatprep.subr.bf16.mxu0 0
  %611 = vmatpush1.bf16.msra.mxu0 0
  %612 = vmatprep.subr.bf16.mxu0 0
  %613 = vmatpush1.bf16.msra.mxu0 0
  %614 = vmatprep.subr.bf16.mxu0 0
  %615 = vmatpush1.bf16.msra.mxu0 0
  %616 = vmatprep.subr.bf16.mxu0 0
  %617 = vmatpush1.bf16.msra.mxu0 0
  %618 = vmatprep.subr.bf16.mxu0 0
  %619 = vmatpush1.bf16.msra.mxu0 0
  %620 = vmatprep.subr.bf16.mxu0 0
  %621 = vmatpush1.bf16.msra.mxu0 0
  %622 = vmatprep.subr.bf16.mxu0 0
  %623 = vmatpush1.bf16.msra.mxu0 0
  %624 = vmatprep.mubr.bf16.mxu0 0
  %625 = vmatmul.mubr.bf16.gmra.mrb[0].mxu0 %v590
  %v626 = vpop.f32.mrb[0].mxu0
  %v627 = vadd.f32 0.0, %v626
  %v628 = vpop.f32.mrb[0].mxu0
  %v629 = vpop.f32.mrb[0].mxu0
  %v630 = vadd.f32 0.0, %v629
  %v631 = vpop.f32.mrb[0].mxu0
  %632 = vdwg.mxu0
  %s633 = scalar_lea.vmem %s10, 16
  %v634 = vld [vmem:[%s633] sm:$0xf]
  %v635 = vld [vmem:[%s633 + $0x4] sm:$0xf]
  %v638 = vunpack.c.l.b16 %v634
  %v639 = vunpack.c.l.b16 %v635
  %v640 = vpack.c.b16 %v639, %v638
  %v642 = vsel %vm536, %v640, 0
  %644 = vmatprep.subr.bf16.mxu0 0
  %645 = vmatpush1.bf16.msra.mxu0 %v534
  %646 = vmatprep.subr.bf16.mxu0 0
  %647 = vmatpush1.bf16.msra.mxu0 0
  %648 = vmatprep.subr.bf16.mxu0 0
  %649 = vmatpush1.bf16.msra.mxu0 0
  %650 = vmatprep.subr.bf16.mxu0 0
  %651 = vmatpush1.bf16.msra.mxu0 0
  %652 = vmatprep.subr.bf16.mxu0 0
  %653 = vmatpush1.bf16.msra.mxu0 0
  %654 = vmatprep.subr.bf16.mxu0 0
  %655 = vmatpush1.bf16.msra.mxu0 0
  %656 = vmatprep.subr.bf16.mxu0 0
  %657 = vmatpush1.bf16.msra.mxu0 0
  %658 = vmatprep.subr.bf16.mxu0 0
  %659 = vmatpush1.bf16.msra.mxu0 0
  %660 = vmatprep.subr.bf16.mxu0 0
  %661 = vmatpush1.bf16.msra.mxu0 0
  %662 = vmatprep.subr.bf16.mxu0 0
  %663 = vmatpush1.bf16.msra.mxu0 0
  %664 = vmatprep.subr.bf16.mxu0 0
  %665 = vmatpush1.bf16.msra.mxu0 0
  %666 = vmatprep.subr.bf16.mxu0 0
  %667 = vmatpush1.bf16.msra.mxu0 0
  %668 = vmatprep.subr.bf16.mxu0 0
  %669 = vmatpush1.bf16.msra.mxu0 0
  %670 = vmatprep.subr.bf16.mxu0 0
  %671 = vmatpush1.bf16.msra.mxu0 0
  %672 = vmatprep.subr.bf16.mxu0 0
  %673 = vmatpush1.bf16.msra.mxu0 0
  %674 = vmatprep.subr.bf16.mxu0 0
  %675 = vmatpush1.bf16.msra.mxu0 0
  %676 = vmatprep.mubr.bf16.mxu0 0
  %677 = vmatmul.mubr.bf16.gmra.mrb[0].mxu0 %v642
  %v678 = vpop.f32.mrb[0].mxu0
  %v679 = vadd.f32 0.0, %v678
  %v680 = vpop.f32.mrb[0].mxu0
  %v681 = vpop.f32.mrb[0].mxu0
  %v682 = vadd.f32 0.0, %v681
  %v683 = vpop.f32.mrb[0].mxu0
  %684 = vdwg.mxu0
  %687 = vrot.lane.b32.xlu0 %v627, 8
  %v688 = vpop.permute.xlu0 %687
  %689 = vrot.lane.b32.xlu0 %v630, 8
  %v690 = vpop.permute.xlu0 %689
  %695 = vrot.lane.b32.xlu0 %v679, 16
  %v696 = vpop.permute.xlu0 %695
  %697 = vrot.lane.b32.xlu0 %v682, 16
  %v698 = vpop.permute.xlu0 %697
  %v701 = vsel %vm84, %v575, %v688
  %v702 = vsel %vm84, %v578, %v690
  %v703 = vsel %vm536, %v701, %v696
  %v704 = vsel %vm536, %v702, %v698
  %v705 = vpack.c.bf16 %v704, %v703
  %v706 = vld [vmem:[%s14] sm:$0xf]
  %v707 = vld [vmem:[%s14 + $0x4] sm:$0xf]
  %v708 = vld [vmem:[%s14 + $0x8] sm:$0xf]
  %v712 = vunpack.c.l.b16 %v706
  %v713 = vunpack.c.l.b16 %v707
  %v714 = vunpack.c.l.b16 %v708
  %v715 = vpack.c.b16 %v713, %v712
  %v716 = vpack.c.b16 %v714, %v714
  %vm718 = vcmask 195584
  %v720 = vsel %vm718, %v705, 0
  %v723 = vsel %vm88, %v716, 0
  %725 = vmatprep.subr.bf16.mxu0 0
  %726 = vmatpush1.bf16.msra.mxu0 %v715
  %727 = vmatprep.subr.bf16.mxu0 0
  %728 = vmatpush1.bf16.msra.mxu0 %v723
  %729 = vmatprep.subr.bf16.mxu0 0
  %730 = vmatpush1.bf16.msra.mxu0 0
  %731 = vmatprep.subr.bf16.mxu0 0
  %732 = vmatpush1.bf16.msra.mxu0 0
  %733 = vmatprep.subr.bf16.mxu0 0
  %734 = vmatpush1.bf16.msra.mxu0 0
  %735 = vmatprep.subr.bf16.mxu0 0
  %736 = vmatpush1.bf16.msra.mxu0 0
  %737 = vmatprep.subr.bf16.mxu0 0
  %738 = vmatpush1.bf16.msra.mxu0 0
  %739 = vmatprep.subr.bf16.mxu0 0
  %740 = vmatpush1.bf16.msra.mxu0 0
  %741 = vmatprep.subr.bf16.mxu0 0
  %742 = vmatpush1.bf16.msra.mxu0 0
  %743 = vmatprep.subr.bf16.mxu0 0
  %744 = vmatpush1.bf16.msra.mxu0 0
  %745 = vmatprep.subr.bf16.mxu0 0
  %746 = vmatpush1.bf16.msra.mxu0 0
  %747 = vmatprep.subr.bf16.mxu0 0
  %748 = vmatpush1.bf16.msra.mxu0 0
  %749 = vmatprep.subr.bf16.mxu0 0
  %750 = vmatpush1.bf16.msra.mxu0 0
  %751 = vmatprep.subr.bf16.mxu0 0
  %752 = vmatpush1.bf16.msra.mxu0 0
  %753 = vmatprep.subr.bf16.mxu0 0
  %754 = vmatpush1.bf16.msra.mxu0 0
  %755 = vmatprep.subr.bf16.mxu0 0
  %756 = vmatpush1.bf16.msra.mxu0 0
  %757 = vmatprep.mubr.bf16.mxu0 0
  %758 = vmatmul.mubr.bf16.gmra.mrb[0].mxu0 %v720
  %v759 = vpop.f32.mrb[0].mxu0
  %v760 = vadd.f32 0.0, %v759
  %v761 = vpop.f32.mrb[0].mxu0
  %v762 = vpop.f32.mrb[0].mxu0
  %v763 = vadd.f32 0.0, %v762
  %v764 = vpop.f32.mrb[0].mxu0
  %765 = vdwg.mxu0
  %v766 = vmax.f32 %v760, 0.0
  %v767 = vmax.f32 %v763, 0.0
  %v768 = vpack.c.bf16 %v767, %v766
  %769 = vmatprep.subr.bf16.mxu0 0
  %770 = vmatpush1.bf16.msra.mxu0 %v768
  %771 = vmatprep.subr.bf16.mxu0 0
  %772 = vmatpush1.bf16.msra.mxu0 0
  %773 = vmatprep.subr.bf16.mxu0 0
  %774 = vmatpush1.bf16.msra.mxu0 0
  %775 = vmatprep.subr.bf16.mxu0 0
  %776 = vmatpush1.bf16.msra.mxu0 0
  %777 = vmatprep.subr.bf16.mxu0 0
  %778 = vmatpush1.bf16.msra.mxu0 0
  %779 = vmatprep.subr.bf16.mxu0 0
  %780 = vmatpush1.bf16.msra.mxu0 0
  %781 = vmatprep.subr.bf16.mxu0 0
  %782 = vmatpush1.bf16.msra.mxu0 0
  %783 = vmatprep.subr.bf16.mxu0 0
  %784 = vmatpush1.bf16.msra.mxu0 0
  %785 = vmatprep.subr.bf16.mxu0 0
  %786 = vmatpush1.bf16.msra.mxu0 0
  %787 = vmatprep.subr.bf16.mxu0 0
  %788 = vmatpush1.bf16.msra.mxu0 0
  %789 = vmatprep.subr.bf16.mxu0 0
  %790 = vmatpush1.bf16.msra.mxu0 0
  %791 = vmatprep.subr.bf16.mxu0 0
  %792 = vmatpush1.bf16.msra.mxu0 0
  %793 = vmatprep.subr.bf16.mxu0 0
  %794 = vmatpush1.bf16.msra.mxu0 0
  %795 = vmatprep.subr.bf16.mxu0 0
  %796 = vmatpush1.bf16.msra.mxu0 0
  %797 = vmatprep.subr.bf16.mxu0 0
  %798 = vmatpush1.bf16.msra.mxu0 0
  %799 = vmatprep.subr.bf16.mxu0 0
  %800 = vmatpush1.bf16.msra.mxu0 0
  %801 = vmatprep.mubr.bf16.mxu0 0
  %802 = vmatmul.mubr.bf16.gmra.mrb[0].mxu0 %v538
  %v803 = vpop.f32.mrb[0].mxu0
  %v804 = vadd.f32 0.0, %v803
  %v805 = vpop.f32.mrb[0].mxu0
  %v806 = vpop.f32.mrb[0].mxu0
  %v807 = vadd.f32 0.0, %v806
  %v808 = vpop.f32.mrb[0].mxu0
  %809 = vdwg.mxu0
  %810 = vmatprep.subr.bf16.mxu0 0
  %811 = vmatpush1.bf16.msra.mxu0 %v768
  %812 = vmatprep.subr.bf16.mxu0 0
  %813 = vmatpush1.bf16.msra.mxu0 0
  %814 = vmatprep.subr.bf16.mxu0 0
  %815 = vmatpush1.bf16.msra.mxu0 0
  %816 = vmatprep.subr.bf16.mxu0 0
  %817 = vmatpush1.bf16.msra.mxu0 0
  %818 = vmatprep.subr.bf16.mxu0 0
  %819 = vmatpush1.bf16.msra.mxu0 0
  %820 = vmatprep.subr.bf16.mxu0 0
  %821 = vmatpush1.bf16.msra.mxu0 0
  %822 = vmatprep.subr.bf16.mxu0 0
  %823 = vmatpush1.bf16.msra.mxu0 0
  %824 = vmatprep.subr.bf16.mxu0 0
  %825 = vmatpush1.bf16.msra.mxu0 0
  %826 = vmatprep.subr.bf16.mxu0 0
  %827 = vmatpush1.bf16.msra.mxu0 0
  %828 = vmatprep.subr.bf16.mxu0 0
  %829 = vmatpush1.bf16.msra.mxu0 0
  %830 = vmatprep.subr.bf16.mxu0 0
  %831 = vmatpush1.bf16.msra.mxu0 0
  %832 = vmatprep.subr.bf16.mxu0 0
  %833 = vmatpush1.bf16.msra.mxu0 0
  %834 = vmatprep.subr.bf16.mxu0 0
  %835 = vmatpush1.bf16.msra.mxu0 0
  %836 = vmatprep.subr.bf16.mxu0 0
  %837 = vmatpush1.bf16.msra.mxu0 0
  %838 = vmatprep.subr.bf16.mxu0 0
  %839 = vmatpush1.bf16.msra.mxu0 0
  %840 = vmatprep.subr.bf16.mxu0 0
  %841 = vmatpush1.bf16.msra.mxu0 0
  %842 = vmatprep.mubr.bf16.mxu0 0
  %843 = vmatmul.mubr.bf16.gmra.mrb[0].mxu0 %v590
  %v844 = vpop.f32.mrb[0].mxu0
  %v845 = vadd.f32 0.0, %v844
  %v846 = vpop.f32.mrb[0].mxu0
  %v847 = vpop.f32.mrb[0].mxu0
  %v848 = vadd.f32 0.0, %v847
  %v849 = vpop.f32.mrb[0].mxu0
  %850 = vdwg.mxu0
  %851 = vmatprep.subr.bf16.mxu0 0
  %852 = vmatpush1.bf16.msra.mxu0 %v768
  %853 = vmatprep.subr.bf16.mxu0 0
  %854 = vmatpush1.bf16.msra.mxu0 0
  %855 = vmatprep.subr.bf16.mxu0 0
  %856 = vmatpush1.bf16.msra.mxu0 0
  %857 = vmatprep.subr.bf16.mxu0 0
  %858 = vmatpush1.bf16.msra.mxu0 0
  %859 = vmatprep.subr.bf16.mxu0 0
  %860 = vmatpush1.bf16.msra.mxu0 0
  %861 = vmatprep.subr.bf16.mxu0 0
  %862 = vmatpush1.bf16.msra.mxu0 0
  %863 = vmatprep.subr.bf16.mxu0 0
  %864 = vmatpush1.bf16.msra.mxu0 0
  %865 = vmatprep.subr.bf16.mxu0 0
  %866 = vmatpush1.bf16.msra.mxu0 0
  %867 = vmatprep.subr.bf16.mxu0 0
  %868 = vmatpush1.bf16.msra.mxu0 0
  %869 = vmatprep.subr.bf16.mxu0 0
  %870 = vmatpush1.bf16.msra.mxu0 0
  %871 = vmatprep.subr.bf16.mxu0 0
  %872 = vmatpush1.bf16.msra.mxu0 0
  %873 = vmatprep.subr.bf16.mxu0 0
  %874 = vmatpush1.bf16.msra.mxu0 0
  %875 = vmatprep.subr.bf16.mxu0 0
  %876 = vmatpush1.bf16.msra.mxu0 0
  %877 = vmatprep.subr.bf16.mxu0 0
  %878 = vmatpush1.bf16.msra.mxu0 0
  %879 = vmatprep.subr.bf16.mxu0 0
  %880 = vmatpush1.bf16.msra.mxu0 0
  %881 = vmatprep.subr.bf16.mxu0 0
  %882 = vmatpush1.bf16.msra.mxu0 0
  %883 = vmatprep.mubr.bf16.mxu0 0
  %884 = vmatmul.mubr.bf16.gmra.mrb[0].mxu0 %v642
  %v885 = vpop.f32.mrb[0].mxu0
  %v886 = vadd.f32 0.0, %v885
  %v887 = vpop.f32.mrb[0].mxu0
  %v888 = vpop.f32.mrb[0].mxu0
  %v889 = vadd.f32 0.0, %v888
  %v890 = vpop.f32.mrb[0].mxu0
  %891 = vdwg.mxu0
  %894 = vrot.lane.b32.xlu0 %v845, 32
  %v895 = vpop.permute.xlu0 %894
  %896 = vrot.lane.b32.xlu0 %v848, 32
  %v897 = vpop.permute.xlu0 %896
  %902 = vrot.lane.b32.xlu0 %v886, 64
  %v903 = vpop.permute.xlu0 %902
  %904 = vrot.lane.b32.xlu0 %v889, 64
  %v905 = vpop.permute.xlu0 %904
  %v908 = vsel %vm207, %v804, %v895
  %v909 = vsel %vm207, %v807, %v897
  %vm910 = vcmask 523264
  %v911 = vsel %vm910, %v908, %v903
  %v912 = vsel %vm910, %v909, %v905
  %v913 = vpack.c.bf16 %v912, %v911
  %v914 = vld [vmem:[%s15] sm:$0xf]
  %v915 = vld [vmem:[%s15 + $0x4] sm:$0xf]
  %v916 = vld [vmem:[%s15 + $0x8] sm:$0xf]
  %v917 = vld [vmem:[%s15 + $0xc] sm:$0xf]
  %v918 = vld [vmem:[%s15 + $0x10] sm:$0xf]
  %v919 = vld [vmem:[%s15 + $0x14] sm:$0xf]
  %v920 = vld [vmem:[%s15 + $0x18] sm:$0xf]
  %v921 = vld [vmem:[%s15 + $0x1c] sm:$0xf]
  %v922 = vld [vmem:[%s15 + $0x20] sm:$0xf]
  %v923 = vld [vmem:[%s15 + $0x24] sm:$0xf]
  %v924 = vld [vmem:[%s15 + $0x28] sm:$0xf]
  %v925 = vld [vmem:[%s15 + $0x2c] sm:$0xf]
  %v938 = vunpack.c.l.b16 %v914
  %v939 = vunpack.c.l.b16 %v915
  %v940 = vunpack.c.l.b16 %v916
  %v941 = vunpack.c.l.b16 %v917
  %v942 = vunpack.c.l.b16 %v918
  %v943 = vunpack.c.l.b16 %v919
  %v944 = vunpack.c.l.b16 %v920
  %v945 = vunpack.c.l.b16 %v921
  %v946 = vunpack.c.l.b16 %v922
  %v947 = vunpack.c.l.b16 %v923
  %v948 = vunpack.c.l.b16 %v924
  %v949 = vunpack.c.l.b16 %v925
  %v950 = vpack.c.b16 %v939, %v938
  %v951 = vpack.c.b16 %v941, %v940
  %v952 = vpack.c.b16 %v943, %v942
  %v953 = vpack.c.b16 %v945, %v944
  %v954 = vpack.c.b16 %v947, %v946
  %v955 = vpack.c.b16 %v949, %v948
  %vm962 = vcmask 785408
  %v964 = vsel %vm962, %v913, 0
  %966 = vmatprep.subr.bf16.mxu0 0
  %967 = vmatpush1.bf16.msra.mxu0 %v950
  %968 = vmatprep.subr.bf16.mxu0 0
  %969 = vmatpush1.bf16.msra.mxu0 %v951
  %970 = vmatprep.subr.bf16.mxu0 0
  %971 = vmatpush1.bf16.msra.mxu0 %v952
  %972 = vmatprep.subr.bf16.mxu0 0
  %973 = vmatpush1.bf16.msra.mxu0 %v953
  %974 = vmatprep.subr.bf16.mxu0 0
  %975 = vmatpush1.bf16.msra.mxu0 %v954
  %976 = vmatprep.subr.bf16.mxu0 0
  %977 = vmatpush1.bf16.msra.mxu0 %v955
  %978 = vmatprep.subr.bf16.mxu0 0
  %979 = vmatpush1.bf16.msra.mxu0 0
  %980 = vmatprep.subr.bf16.mxu0 0
  %981 = vmatpush1.bf16.msra.mxu0 0
  %982 = vmatprep.subr.bf16.mxu0 0
  %983 = vmatpush1.bf16.msra.mxu0 0
  %984 = vmatprep.subr.bf16.mxu0 0
  %985 = vmatpush1.bf16.msra.mxu0 0
  %986 = vmatprep.subr.bf16.mxu0 0
  %987 = vmatpush1.bf16.msra.mxu0 0
  %988 = vmatprep.subr.bf16.mxu0 0
  %989 = vmatpush1.bf16.msra.mxu0 0
  %990 = vmatprep.subr.bf16.mxu0 0
  %991 = vmatpush1.bf16.msra.mxu0 0
  %992 = vmatprep.subr.bf16.mxu0 0
  %993 = vmatpush1.bf16.msra.mxu0 0
  %994 = vmatprep.subr.bf16.mxu0 0
  %995 = vmatpush1.bf16.msra.mxu0 0
  %996 = vmatprep.subr.bf16.mxu0 0
  %997 = vmatpush1.bf16.msra.mxu0 0
  %998 = vmatprep.mubr.bf16.mxu0 0
  %999 = vmatmul.mubr.bf16.gmra.mrb[0].mxu0 %v964
  %v1000 = vpop.f32.mrb[0].mxu0
  %v1001 = vadd.f32 0.0, %v1000
  %v1002 = vpop.f32.mrb[0].mxu0
  %v1003 = vpop.f32.mrb[0].mxu0
  %v1004 = vadd.f32 0.0, %v1003
  %v1005 = vpop.f32.mrb[0].mxu0
  %1006 = vdwg.mxu0
  %v1007 = vmax.f32 %v1001, 0.0
  %v1008 = vmax.f32 %v1004, 0.0
  %v1009 = vld [vmem:[%s2] sm:$0x3]
  %v1011 = vsel %vm139, %v1009, 0
  %v1014 = vsel %vm88, %v298, 0
  %1016 = vmatprep.subr.mxu0 0.0
  %1017 = vmatpush1.msra.mxu0 %v297
  %1018 = vmatprep.subr.mxu0 0.0
  %1019 = vmatpush1.msra.mxu0 %v1014
  %1020 = vmatprep.subr.mxu0 0.0
  %1021 = vmatpush1.msra.mxu0 0.0
  %1022 = vmatprep.subr.mxu0 0.0
  %1023 = vmatpush1.msra.mxu0 0.0
  %1024 = vmatprep.subr.mxu0 0.0
  %1025 = vmatpush1.msra.mxu0 0.0
  %1026 = vmatprep.subr.mxu0 0.0
  %1027 = vmatpush1.msra.mxu0 0.0
  %1028 = vmatprep.subr.mxu0 0.0
  %1029 = vmatpush1.msra.mxu0 0.0
  %1030 = vmatprep.subr.mxu0 0.0
  %1031 = vmatpush1.msra.mxu0 0.0
  %1032 = vmatprep.subr.mxu0 0.0
  %1033 = vmatpush1.msra.mxu0 0.0
  %1034 = vmatprep.subr.mxu0 0.0
  %1035 = vmatpush1.msra.mxu0 0.0
  %1036 = vmatprep.subr.mxu0 0.0
  %1037 = vmatpush1.msra.mxu0 0.0
  %1038 = vmatprep.subr.mxu0 0.0
  %1039 = vmatpush1.msra.mxu0 0.0
  %1040 = vmatprep.subr.mxu0 0.0
  %1041 = vmatpush1.msra.mxu0 0.0
  %1042 = vmatprep.subr.mxu0 0.0
  %1043 = vmatpush1.msra.mxu0 0.0
  %1044 = vmatprep.subr.mxu0 0.0
  %1045 = vmatpush1.msra.mxu0 0.0
  %1046 = vmatprep.subr.mxu0 0.0
  %1047 = vmatpush1.msra.mxu0 0.0
  %1048 = vmatprep.subr.mxu0 0.0
  %1049 = vmatpush1.msra.mxu0 0.0
  %1050 = vmatprep.subr.mxu0 0.0
  %1051 = vmatpush1.msra.mxu0 0.0
  %1052 = vmatprep.subr.mxu0 0.0
  %1053 = vmatpush1.msra.mxu0 0.0
  %1054 = vmatprep.subr.mxu0 0.0
  %1055 = vmatpush1.msra.mxu0 0.0
  %1056 = vmatprep.subr.mxu0 0.0
  %1057 = vmatpush1.msra.mxu0 0.0
  %1058 = vmatprep.subr.mxu0 0.0
  %1059 = vmatpush1.msra.mxu0 0.0
  %1060 = vmatprep.subr.mxu0 0.0
  %1061 = vmatpush1.msra.mxu0 0.0
  %1062 = vmatprep.subr.mxu0 0.0
  %1063 = vmatpush1.msra.mxu0 0.0
  %1064 = vmatprep.subr.mxu0 0.0
  %1065 = vmatpush1.msra.mxu0 0.0
  %1066 = vmatprep.subr.mxu0 0.0
  %1067 = vmatpush1.msra.mxu0 0.0
  %1068 = vmatprep.subr.mxu0 0.0
  %1069 = vmatpush1.msra.mxu0 0.0
  %1070 = vmatprep.subr.mxu0 0.0
  %1071 = vmatpush1.msra.mxu0 0.0
  %1072 = vmatprep.subr.mxu0 0.0
  %1073 = vmatpush1.msra.mxu0 0.0
  %1074 = vmatprep.subr.mxu0 0.0
  %1075 = vmatpush1.msra.mxu0 0.0
  %1076 = vmatprep.subr.mxu0 0.0
  %1077 = vmatpush1.msra.mxu0 0.0
  %1078 = vmatprep.subr.mxu0 0.0
  %1079 = vmatpush1.msra.mxu0 0.0
  %1080 = vmatprep.mubr.f32.mxu0 0.0
  %1081 = vmatmul.mubr.f32.gmra.mrb[0].mxu0 %v1011
  %v1082 = vpop.f32.mrb[0].mxu0
  %v1083 = vadd.f32 0.0, %v1082
  %v1084 = vpop.f32.mrb[0].mxu0
  %1085 = vdwg.mxu0
  %v1086 = vld [vmem:[%s7] sm:$0x3]
  %v1088 = vsel %vm362, %v1086, 0
  %vm1090 = vcmask 1041408
  %v1092 = vsel %vm1090, %v520, 0
  %1094 = vmatprep.subr.mxu0 0.0
  %1095 = vmatpush1.msra.mxu0 %v519
  %1096 = vmatprep.subr.mxu0 0.0
  %1097 = vmatpush1.msra.mxu0 %v1092
  %1098 = vmatprep.subr.mxu0 0.0
  %1099 = vmatpush1.msra.mxu0 0.0
  %1100 = vmatprep.subr.mxu0 0.0
  %1101 = vmatpush1.msra.mxu0 0.0
  %1102 = vmatprep.subr.mxu0 0.0
  %1103 = vmatpush1.msra.mxu0 0.0
  %1104 = vmatprep.subr.mxu0 0.0
  %1105 = vmatpush1.msra.mxu0 0.0
  %1106 = vmatprep.subr.mxu0 0.0
  %1107 = vmatpush1.msra.mxu0 0.0
  %1108 = vmatprep.subr.mxu0 0.0
  %1109 = vmatpush1.msra.mxu0 0.0
  %1110 = vmatprep.subr.mxu0 0.0
  %1111 = vmatpush1.msra.mxu0 0.0
  %1112 = vmatprep.subr.mxu0 0.0
  %1113 = vmatpush1.msra.mxu0 0.0
  %1114 = vmatprep.subr.mxu0 0.0
  %1115 = vmatpush1.msra.mxu0 0.0
  %1116 = vmatprep.subr.mxu0 0.0
  %1117 = vmatpush1.msra.mxu0 0.0
  %1118 = vmatprep.subr.mxu0 0.0
  %1119 = vmatpush1.msra.mxu0 0.0
  %1120 = vmatprep.subr.mxu0 0.0
  %1121 = vmatpush1.msra.mxu0 0.0
  %1122 = vmatprep.subr.mxu0 0.0
  %1123 = vmatpush1.msra.mxu0 0.0
  %1124 = vmatprep.subr.mxu0 0.0
  %1125 = vmatpush1.msra.mxu0 0.0
  %1126 = vmatprep.subr.mxu0 0.0
  %1127 = vmatpush1.msra.mxu0 0.0
  %1128 = vmatprep.subr.mxu0 0.0
  %1129 = vmatpush1.msra.mxu0 0.0
  %1130 = vmatprep.subr.mxu0 0.0
  %1131 = vmatpush1.msra.mxu0 0.0
  %1132 = vmatprep.subr.mxu0 0.0
  %1133 = vmatpush1.msra.mxu0 0.0
  %1134 = vmatprep.subr.mxu0 0.0
  %1135 = vmatpush1.msra.mxu0 0.0
  %1136 = vmatprep.subr.mxu0 0.0
  %1137 = vmatpush1.msra.mxu0 0.0
  %1138 = vmatprep.subr.mxu0 0.0
  %1139 = vmatpush1.msra.mxu0 0.0
  %1140 = vmatprep.subr.mxu0 0.0
  %1141 = vmatpush1.msra.mxu0 0.0
  %1142 = vmatprep.subr.mxu0 0.0
  %1143 = vmatpush1.msra.mxu0 0.0
  %1144 = vmatprep.subr.mxu0 0.0
  %1145 = vmatpush1.msra.mxu0 0.0
  %1146 = vmatprep.subr.mxu0 0.0
  %1147 = vmatpush1.msra.mxu0 0.0
  %1148 = vmatprep.subr.mxu0 0.0
  %1149 = vmatpush1.msra.mxu0 0.0
  %1150 = vmatprep.subr.mxu0 0.0
  %1151 = vmatpush1.msra.mxu0 0.0
  %1152 = vmatprep.subr.mxu0 0.0
  %1153 = vmatpush1.msra.mxu0 0.0
  %1154 = vmatprep.subr.mxu0 0.0
  %1155 = vmatpush1.msra.mxu0 0.0
  %1156 = vmatprep.subr.mxu0 0.0
  %1157 = vmatpush1.msra.mxu0 0.0
  %1158 = vmatprep.mubr.f32.mxu0 0.0
  %1159 = vmatmul.mubr.f32.gmra.mrb[0].mxu0 %v1088
  %v1160 = vpop.f32.mrb[0].mxu0
  %v1161 = vadd.f32 0.0, %v1160
  %v1162 = vpop.f32.mrb[0].mxu0
  %1163 = vdwg.mxu0
  %v1164 = vld [vmem:[%s12] sm:$0x3]
  %v1166 = vsel %vm536, %v1164, 0
  %1168 = vmatprep.subr.mxu0 0.0
  %1169 = vmatpush1.msra.mxu0 %v1007
  %1170 = vmatprep.subr.mxu0 0.0
  %1171 = vmatpush1.msra.mxu0 %v1008
  %1172 = vmatprep.subr.mxu0 0.0
  %1173 = vmatpush1.msra.mxu0 0.0
  %1174 = vmatprep.subr.mxu0 0.0
  %1175 = vmatpush1.msra.mxu0 0.0
  %1176 = vmatprep.subr.mxu0 0.0
  %1177 = vmatpush1.msra.mxu0 0.0
  %1178 = vmatprep.subr.mxu0 0.0
  %1179 = vmatpush1.msra.mxu0 0.0
  %1180 = vmatprep.subr.mxu0 0.0
  %1181 = vmatpush1.msra.mxu0 0.0
  %1182 = vmatprep.subr.mxu0 0.0
  %1183 = vmatpush1.msra.mxu0 0.0
  %1184 = vmatprep.subr.mxu0 0.0
  %1185 = vmatpush1.msra.mxu0 0.0
  %1186 = vmatprep.subr.mxu0 0.0
  %1187 = vmatpush1.msra.mxu0 0.0
  %1188 = vmatprep.subr.mxu0 0.0
  %1189 = vmatpush1.msra.mxu0 0.0
  %1190 = vmatprep.subr.mxu0 0.0
  %1191 = vmatpush1.msra.mxu0 0.0
  %1192 = vmatprep.subr.mxu0 0.0
  %1193 = vmatpush1.msra.mxu0 0.0
  %1194 = vmatprep.subr.mxu0 0.0
  %1195 = vmatpush1.msra.mxu0 0.0
  %1196 = vmatprep.subr.mxu0 0.0
  %1197 = vmatpush1.msra.mxu0 0.0
  %1198 = vmatprep.subr.mxu0 0.0
  %1199 = vmatpush1.msra.mxu0 0.0
  %1200 = vmatprep.subr.mxu0 0.0
  %1201 = vmatpush1.msra.mxu0 0.0
  %1202 = vmatprep.subr.mxu0 0.0
  %1203 = vmatpush1.msra.mxu0 0.0
  %1204 = vmatprep.subr.mxu0 0.0
  %1205 = vmatpush1.msra.mxu0 0.0
  %1206 = vmatprep.subr.mxu0 0.0
  %1207 = vmatpush1.msra.mxu0 0.0
  %1208 = vmatprep.subr.mxu0 0.0
  %1209 = vmatpush1.msra.mxu0 0.0
  %1210 = vmatprep.subr.mxu0 0.0
  %1211 = vmatpush1.msra.mxu0 0.0
  %1212 = vmatprep.subr.mxu0 0.0
  %1213 = vmatpush1.msra.mxu0 0.0
  %1214 = vmatprep.subr.mxu0 0.0
  %1215 = vmatpush1.msra.mxu0 0.0
  %1216 = vmatprep.subr.mxu0 0.0
  %1217 = vmatpush1.msra.mxu0 0.0
  %1218 = vmatprep.subr.mxu0 0.0
  %1219 = vmatpush1.msra.mxu0 0.0
  %1220 = vmatprep.subr.mxu0 0.0
  %1221 = vmatpush1.msra.mxu0 0.0
  %1222 = vmatprep.subr.mxu0 0.0
  %1223 = vmatpush1.msra.mxu0 0.0
  %1224 = vmatprep.subr.mxu0 0.0
  %1225 = vmatpush1.msra.mxu0 0.0
  %1226 = vmatprep.subr.mxu0 0.0
  %1227 = vmatpush1.msra.mxu0 0.0
  %1228 = vmatprep.subr.mxu0 0.0
  %1229 = vmatpush1.msra.mxu0 0.0
  %1230 = vmatprep.subr.mxu0 0.0
  %1231 = vmatpush1.msra.mxu0 0.0
  %1232 = vmatprep.mubr.f32.mxu0 0.0
  %1233 = vmatmul.mubr.f32.gmra.mrb[0].mxu0 %v1166
  %v1234 = vpop.f32.mrb[0].mxu0
  %v1235 = vadd.f32 0.0, %v1234
  %v1236 = vpop.f32.mrb[0].mxu0
  %1237 = vdwg.mxu0
  %v1238 = vld [vmem:[%s13] sm:$0x3]
  %v1240 = vsel %vm536, %v1238, 0
  %1242 = vmatprep.subr.mxu0 0.0
  %1243 = vmatpush1.msra.mxu0 %v1007
  %1244 = vmatprep.subr.mxu0 0.0
  %1245 = vmatpush1.msra.mxu0 %v1008
  %1246 = vmatprep.subr.mxu0 0.0
  %1247 = vmatpush1.msra.mxu0 0.0
  %1248 = vmatprep.subr.mxu0 0.0
  %1249 = vmatpush1.msra.mxu0 0.0
  %1250 = vmatprep.subr.mxu0 0.0
  %1251 = vmatpush1.msra.mxu0 0.0
  %1252 = vmatprep.subr.mxu0 0.0
  %1253 = vmatpush1.msra.mxu0 0.0
  %1254 = vmatprep.subr.mxu0 0.0
  %1255 = vmatpush1.msra.mxu0 0.0
  %1256 = vmatprep.subr.mxu0 0.0
  %1257 = vmatpush1.msra.mxu0 0.0
  %1258 = vmatprep.subr.mxu0 0.0
  %1259 = vmatpush1.msra.mxu0 0.0
  %1260 = vmatprep.subr.mxu0 0.0
  %1261 = vmatpush1.msra.mxu0 0.0
  %1262 = vmatprep.subr.mxu0 0.0
  %1263 = vmatpush1.msra.mxu0 0.0
  %1264 = vmatprep.subr.mxu0 0.0
  %1265 = vmatpush1.msra.mxu0 0.0
  %1266 = vmatprep.subr.mxu0 0.0
  %1267 = vmatpush1.msra.mxu0 0.0
  %1268 = vmatprep.subr.mxu0 0.0
  %1269 = vmatpush1.msra.mxu0 0.0
  %1270 = vmatprep.subr.mxu0 0.0
  %1271 = vmatpush1.msra.mxu0 0.0
  %1272 = vmatprep.subr.mxu0 0.0
  %1273 = vmatpush1.msra.mxu0 0.0
  %1274 = vmatprep.subr.mxu0 0.0
  %1275 = vmatpush1.msra.mxu0 0.0
  %1276 = vmatprep.subr.mxu0 0.0
  %1277 = vmatpush1.msra.mxu0 0.0
  %1278 = vmatprep.subr.mxu0 0.0
  %1279 = vmatpush1.msra.mxu0 0.0
  %1280 = vmatprep.subr.mxu0 0.0
  %1281 = vmatpush1.msra.mxu0 0.0
  %1282 = vmatprep.subr.mxu0 0.0
  %1283 = vmatpush1.msra.mxu0 0.0
  %1284 = vmatprep.subr.mxu0 0.0
  %1285 = vmatpush1.msra.mxu0 0.0
  %1286 = vmatprep.subr.mxu0 0.0
  %1287 = vmatpush1.msra.mxu0 0.0
  %1288 = vmatprep.subr.mxu0 0.0
  %1289 = vmatpush1.msra.mxu0 0.0
  %1290 = vmatprep.subr.mxu0 0.0
  %1291 = vmatpush1.msra.mxu0 0.0
  %1292 = vmatprep.subr.mxu0 0.0
  %1293 = vmatpush1.msra.mxu0 0.0
  %1294 = vmatprep.subr.mxu0 0.0
  %1295 = vmatpush1.msra.mxu0 0.0
  %1296 = vmatprep.subr.mxu0 0.0
  %1297 = vmatpush1.msra.mxu0 0.0
  %1298 = vmatprep.subr.mxu0 0.0
  %1299 = vmatpush1.msra.mxu0 0.0
  %1300 = vmatprep.subr.mxu0 0.0
  %1301 = vmatpush1.msra.mxu0 0.0
  %1302 = vmatprep.subr.mxu0 0.0
  %1303 = vmatpush1.msra.mxu0 0.0
  %1304 = vmatprep.subr.mxu0 0.0
  %1305 = vmatpush1.msra.mxu0 0.0
  %1306 = vmatprep.mubr.f32.mxu0 0.0
  %1307 = vmatmul.mubr.f32.gmra.mrb[0].mxu0 %v1240
  %v1308 = vpop.f32.mrb[0].mxu0
  %v1309 = vadd.f32 0.0, %v1308
  %v1310 = vpop.f32.mrb[0].mxu0
  %1311 = vdwg.mxu0
  %1313 = vrot.lane.b32.xlu0 %v1161, 16
  %v1314 = vpop.permute.xlu0 %1313
  %1317 = vrot.lane.b32.xlu0 %v1235, 32
  %v1318 = vpop.permute.xlu0 %1317
  %1321 = vrot.lane.b32.xlu0 %v1309, 48
  %v1322 = vpop.permute.xlu0 %1321
  %v1324 = vsel %vm536, %v1083, %v1314
  %v1325 = vsel %vm207, %v1324, %v1318
  %vm1326 = vcmask 392192
  %v1327 = vsel %vm1326, %v1325, %v1322
  %v1328 = vld [vmem:[%s16] sm:$0xff]
  %v1329 = vld [vmem:[%s16 + $0x8] sm:$0xff]
  %v1330 = vld [vmem:[%s16 + $0x10] sm:$0xff]
  %v1331 = vld [vmem:[%s16 + $0x18] sm:$0xff]
  %v1332 = vld [vmem:[%s16 + $0x20] sm:$0xff]
  %v1333 = vld [vmem:[%s16 + $0x28] sm:$0xff]
  %v1334 = vld [vmem:[%s16 + $0x30] sm:$0xff]
  %v1335 = vld [vmem:[%s16 + $0x38] sm:$0xff]
  %v1336 = vld [vmem:[%s17] sm:$0x1]
  %v1338 = vlaneseq
  %v1339 = vshrl.u32 %v1338, 7
  %v1340 = vsub.s32 0, %v1339
  %v1341 = vrot.slane %v1336, %v1340
  %v1344 = vsel %vm910, %v1327, 0
  %1346 = vmatprep.subr.mxu0 0.0
  %1347 = vmatpush1.msra.mxu0 %v1328
  %1348 = vmatprep.subr.mxu0 0.0
  %1349 = vmatpush1.msra.mxu0 %v1329
  %1350 = vmatprep.subr.mxu0 0.0
  %1351 = vmatpush1.msra.mxu0 %v1330
  %1352 = vmatprep.subr.mxu0 0.0
  %1353 = vmatpush1.msra.mxu0 %v1331
  %1354 = vmatprep.subr.mxu0 0.0
  %1355 = vmatpush1.msra.mxu0 %v1332
  %1356 = vmatprep.subr.mxu0 0.0
  %1357 = vmatpush1.msra.mxu0 %v1333
  %1358 = vmatprep.subr.mxu0 0.0
  %1359 = vmatpush1.msra.mxu0 %v1334
  %1360 = vmatprep.subr.mxu0 0.0
  %1361 = vmatpush1.msra.mxu0 %v1335
  %1362 = vmatprep.subr.mxu0 0.0
  %1363 = vmatpush1.msra.mxu0 0.0
  %1364 = vmatprep.subr.mxu0 0.0
  %1365 = vmatpush1.msra.mxu0 0.0
  %1366 = vmatprep.subr.mxu0 0.0
  %1367 = vmatpush1.msra.mxu0 0.0
  %1368 = vmatprep.subr.mxu0 0.0
  %1369 = vmatpush1.msra.mxu0 0.0
  %1370 = vmatprep.subr.mxu0 0.0
  %1371 = vmatpush1.msra.mxu0 0.0
  %1372 = vmatprep.subr.mxu0 0.0
  %1373 = vmatpush1.msra.mxu0 0.0
  %1374 = vmatprep.subr.mxu0 0.0
  %1375 = vmatpush1.msra.mxu0 0.0
  %1376 = vmatprep.subr.mxu0 0.0
  %1377 = vmatpush1.msra.mxu0 0.0
  %1378 = vmatprep.subr.mxu0 0.0
  %1379 = vmatpush1.msra.mxu0 0.0
  %1380 = vmatprep.subr.mxu0 0.0
  %1381 = vmatpush1.msra.mxu0 0.0
  %1382 = vmatprep.subr.mxu0 0.0
  %1383 = vmatpush1.msra.mxu0 0.0
  %1384 = vmatprep.subr.mxu0 0.0
  %1385 = vmatpush1.msra.mxu0 0.0
  %1386 = vmatprep.subr.mxu0 0.0
  %1387 = vmatpush1.msra.mxu0 0.0
  %1388 = vmatprep.subr.mxu0 0.0
  %1389 = vmatpush1.msra.mxu0 0.0
  %1390 = vmatprep.subr.mxu0 0.0
  %1391 = vmatpush1.msra.mxu0 0.0
  %1392 = vmatprep.subr.mxu0 0.0
  %1393 = vmatpush1.msra.mxu0 0.0
  %1394 = vmatprep.subr.mxu0 0.0
  %1395 = vmatpush1.msra.mxu0 0.0
  %1396 = vmatprep.subr.mxu0 0.0
  %1397 = vmatpush1.msra.mxu0 0.0
  %1398 = vmatprep.subr.mxu0 0.0
  %1399 = vmatpush1.msra.mxu0 0.0
  %1400 = vmatprep.subr.mxu0 0.0
  %1401 = vmatpush1.msra.mxu0 0.0
  %1402 = vmatprep.subr.mxu0 0.0
  %1403 = vmatpush1.msra.mxu0 0.0
  %1404 = vmatprep.subr.mxu0 0.0
  %1405 = vmatpush1.msra.mxu0 0.0
  %1406 = vmatprep.subr.mxu0 0.0
  %1407 = vmatpush1.msra.mxu0 0.0
  %1408 = vmatprep.subr.mxu0 0.0
  %1409 = vmatpush1.msra.mxu0 0.0
  %1410 = vmatprep.mubr.f32.mxu0 0.0
  %1411 = vmatmul.mubr.f32.gmra.mrb[0].mxu0 %v1344
  %v1412 = vpop.f32.mrb[0].mxu0
  %v1413 = vadd.f32 %v1341, %v1412
  %v1414 = vpop.f32.mrb[0].mxu0
  %1415 = vdwg.mxu0
  %v1416 = vmax.f32 %v1413, 0.0
  %v1417 = vld [vmem:[%s18] sm:$0xff]
  %v1418 = vld [vmem:[%s18 + $0x8] sm:$0xff]
  %v1419 = vld [vmem:[%s18 + $0x10] sm:$0xff]
  %v1420 = vld [vmem:[%s18 + $0x18] sm:$0xff]
  %v1421 = vld [vmem:[%s18 + $0x20] sm:$0xff]
  %v1422 = vld [vmem:[%s18 + $0x28] sm:$0xff]
  %v1423 = vld [vmem:[%s18 + $0x30] sm:$0xff]
  %v1424 = vld [vmem:[%s18 + $0x38] sm:$0xff]
  %v1425 = vld [vmem:[%s19] sm:$0x1]
  %v1427 = vlaneseq
  %v1428 = vshrl.u32 %v1427, 7
  %v1429 = vsub.s32 0, %v1428
  %v1430 = vrot.slane %v1425, %v1429
  %v1433 = vsel %vm910, %v1416, 0
  %1435 = vmatprep.subr.mxu0 0.0
  %1436 = vmatpush1.msra.mxu0 %v1417
  %1437 = vmatprep.subr.mxu0 0.0
  %1438 = vmatpush1.msra.mxu0 %v1418
  %1439 = vmatprep.subr.mxu0 0.0
  %1440 = vmatpush1.msra.mxu0 %v1419
  %1441 = vmatprep.subr.mxu0 0.0
  %1442 = vmatpush1.msra.mxu0 %v1420
  %1443 = vmatprep.subr.mxu0 0.0
  %1444 = vmatpush1.msra.mxu0 %v1421
  %1445 = vmatprep.subr.mxu0 0.0
  %1446 = vmatpush1.msra.mxu0 %v1422
  %1447 = vmatprep.subr.mxu0 0.0
  %1448 = vmatpush1.msra.mxu0 %v1423
  %1449 = vmatprep.subr.mxu0 0.0
  %1450 = vmatpush1.msra.mxu0 %v1424
  %1451 = vmatprep.subr.mxu0 0.0
  %1452 = vmatpush1.msra.mxu0 0.0
  %1453 = vmatprep.subr.mxu0 0.0
  %1454 = vmatpush1.msra.mxu0 0.0
  %1455 = vmatprep.subr.mxu0 0.0
  %1456 = vmatpush1.msra.mxu0 0.0
  %1457 = vmatprep.subr.mxu0 0.0
  %1458 = vmatpush1.msra.mxu0 0.0
  %1459 = vmatprep.subr.mxu0 0.0
  %1460 = vmatpush1.msra.mxu0 0.0
  %1461 = vmatprep.subr.mxu0 0.0
  %1462 = vmatpush1.msra.mxu0 0.0
  %1463 = vmatprep.subr.mxu0 0.0
  %1464 = vmatpush1.msra.mxu0 0.0
  %1465 = vmatprep.subr.mxu0 0.0
  %1466 = vmatpush1.msra.mxu0 0.0
  %1467 = vmatprep.subr.mxu0 0.0
  %1468 = vmatpush1.msra.mxu0 0.0
  %1469 = vmatprep.subr.mxu0 0.0
  %1470 = vmatpush1.msra.mxu0 0.0
  %1471 = vmatprep.subr.mxu0 0.0
  %1472 = vmatpush1.msra.mxu0 0.0
  %1473 = vmatprep.subr.mxu0 0.0
  %1474 = vmatpush1.msra.mxu0 0.0
  %1475 = vmatprep.subr.mxu0 0.0
  %1476 = vmatpush1.msra.mxu0 0.0
  %1477 = vmatprep.subr.mxu0 0.0
  %1478 = vmatpush1.msra.mxu0 0.0
  %1479 = vmatprep.subr.mxu0 0.0
  %1480 = vmatpush1.msra.mxu0 0.0
  %1481 = vmatprep.subr.mxu0 0.0
  %1482 = vmatpush1.msra.mxu0 0.0
  %1483 = vmatprep.subr.mxu0 0.0
  %1484 = vmatpush1.msra.mxu0 0.0
  %1485 = vmatprep.subr.mxu0 0.0
  %1486 = vmatpush1.msra.mxu0 0.0
  %1487 = vmatprep.subr.mxu0 0.0
  %1488 = vmatpush1.msra.mxu0 0.0
  %1489 = vmatprep.subr.mxu0 0.0
  %1490 = vmatpush1.msra.mxu0 0.0
  %1491 = vmatprep.subr.mxu0 0.0
  %1492 = vmatpush1.msra.mxu0 0.0
  %1493 = vmatprep.subr.mxu0 0.0
  %1494 = vmatpush1.msra.mxu0 0.0
  %1495 = vmatprep.subr.mxu0 0.0
  %1496 = vmatpush1.msra.mxu0 0.0
  %1497 = vmatprep.subr.mxu0 0.0
  %1498 = vmatpush1.msra.mxu0 0.0
  %1499 = vmatprep.mubr.f32.mxu0 0.0
  %1500 = vmatmul.mubr.f32.gmra.mrb[0].mxu0 %v1433
  %v1501 = vpop.f32.mrb[0].mxu0
  %v1502 = vadd.f32 %v1430, %v1501
  %v1503 = vpop.f32.mrb[0].mxu0
  %1504 = vdwg.mxu0
  %v1505 = vmax.f32 %v1502, 0.0
  %v1506 = vld [vmem:[%s20] sm:$0xff]
  %v1507 = vld [vmem:[%s20 + $0x8] sm:$0xff]
  %v1508 = vld [vmem:[%s20 + $0x10] sm:$0xff]
  %v1509 = vld [vmem:[%s20 + $0x18] sm:$0xff]
  %v1510 = vld [vmem:[#allocation2] sm:$0x1]
  %v1512 = vlaneseq
  %v1513 = vshrl.u32 %v1512, 7
  %v1514 = vsub.s32 0, %v1513
  %v1515 = vrot.slane %v1510, %v1514
  %v1518 = vsel %vm207, %v1505, 0
  %1520 = vmatprep.subr.mxu0 0.0
  %1521 = vmatpush1.msra.mxu0 %v1506
  %1522 = vmatprep.subr.mxu0 0.0
  %1523 = vmatpush1.msra.mxu0 %v1507
  %1524 = vmatprep.subr.mxu0 0.0
  %1525 = vmatpush1.msra.mxu0 %v1508
  %1526 = vmatprep.subr.mxu0 0.0
  %1527 = vmatpush1.msra.mxu0 %v1509
  %1528 = vmatprep.subr.mxu0 0.0
  %1529 = vmatpush1.msra.mxu0 0.0
  %1530 = vmatprep.subr.mxu0 0.0
  %1531 = vmatpush1.msra.mxu0 0.0
  %1532 = vmatprep.subr.mxu0 0.0
  %1533 = vmatpush1.msra.mxu0 0.0
  %1534 = vmatprep.subr.mxu0 0.0
  %1535 = vmatpush1.msra.mxu0 0.0
  %1536 = vmatprep.subr.mxu0 0.0
  %1537 = vmatpush1.msra.mxu0 0.0
  %1538 = vmatprep.subr.mxu0 0.0
  %1539 = vmatpush1.msra.mxu0 0.0
  %1540 = vmatprep.subr.mxu0 0.0
  %1541 = vmatpush1.msra.mxu0 0.0
  %1542 = vmatprep.subr.mxu0 0.0
  %1543 = vmatpush1.msra.mxu0 0.0
  %1544 = vmatprep.subr.mxu0 0.0
  %1545 = vmatpush1.msra.mxu0 0.0
  %1546 = vmatprep.subr.mxu0 0.0
  %1547 = vmatpush1.msra.mxu0 0.0
  %1548 = vmatprep.subr.mxu0 0.0
  %1549 = vmatpush1.msra.mxu0 0.0
  %1550 = vmatprep.subr.mxu0 0.0
  %1551 = vmatpush1.msra.mxu0 0.0
  %1552 = vmatprep.subr.mxu0 0.0
  %1553 = vmatpush1.msra.mxu0 0.0
  %1554 = vmatprep.subr.mxu0 0.0
  %1555 = vmatpush1.msra.mxu0 0.0
  %1556 = vmatprep.subr.mxu0 0.0
  %1557 = vmatpush1.msra.mxu0 0.0
  %1558 = vmatprep.subr.mxu0 0.0
  %1559 = vmatpush1.msra.mxu0 0.0
  %1560 = vmatprep.subr.mxu0 0.0
  %1561 = vmatpush1.msra.mxu0 0.0
  %1562 = vmatprep.subr.mxu0 0.0
  %1563 = vmatpush1.msra.mxu0 0.0
  %1564 = vmatprep.subr.mxu0 0.0
  %1565 = vmatpush1.msra.mxu0 0.0
  %1566 = vmatprep.subr.mxu0 0.0
  %1567 = vmatpush1.msra.mxu0 0.0
  %1568 = vmatprep.subr.mxu0 0.0
  %1569 = vmatpush1.msra.mxu0 0.0
  %1570 = vmatprep.subr.mxu0 0.0
  %1571 = vmatpush1.msra.mxu0 0.0
  %1572 = vmatprep.subr.mxu0 0.0
  %1573 = vmatpush1.msra.mxu0 0.0
  %1574 = vmatprep.subr.mxu0 0.0
  %1575 = vmatpush1.msra.mxu0 0.0
  %1576 = vmatprep.subr.mxu0 0.0
  %1577 = vmatpush1.msra.mxu0 0.0
  %1578 = vmatprep.subr.mxu0 0.0
  %1579 = vmatpush1.msra.mxu0 0.0
  %1580 = vmatprep.subr.mxu0 0.0
  %1581 = vmatpush1.msra.mxu0 0.0
  %1582 = vmatprep.subr.mxu0 0.0
  %1583 = vmatpush1.msra.mxu0 0.0
  %1584 = vmatprep.mubr.f32.mxu0 0.0
  %1585 = vmatmul.mubr.f32.gmra.mrb[0].mxu0 %v1518
  %v1586 = vpop.f32.mrb[0].mxu0
  %v1587 = vadd.f32 %v1515, %v1586
  %v1588 = vpop.f32.mrb[0].mxu0
  %1589 = vdwg.mxu0
  %vm1590 = vcmask 1024
  %1591 = vst.msk [vmem:[%s22] sm:$0x3] %vm1590, %v1587
  // Predicated region
  $region90: #{tpu_custom_call.1} parent=0 // pred_check
    _
  $region91: #{tpu_custom_call.1} parent=0 // pred_check_branch
    %1593 = sbr.rel (0) target = $region93
  $region92: #{tpu_custom_call.1} parent=0 // pred_region
    _
  $region93: #{tpu_custom_call.1} parent=0 // pred_fallthru
    _
  // Predicated region
  $region94: #{tpu_custom_call.1} parent=0 // pred_check
    _
  $region95: #{tpu_custom_call.1} parent=0 // pred_check_branch
    %1595 = sbr.rel (0) target = $region97
  $region96: #{tpu_custom_call.1} parent=0 // pred_region
    _
  $region97: #{tpu_custom_call.1} parent=0 // pred_fallthru
    _

</llo_original>
